<compile_context>
chip_gen: v5e
topology: v5e:2x2
jax: 0.10.0
libtpu: 0.0.40
codegen_flags: <defaults>
</compile_context>

<pallas_src>
import math

import numpy as np
import jax
import jax.numpy as jnp
from jax.experimental import pallas as pl
from jax.experimental.pallas import tpu as pltpu


# ----------------------------------------------------------------------------
# Static constants (match gaussian()/create_window() in the PyTorch reference)
# ----------------------------------------------------------------------------
def _gaussian_1d(window_size: int, sigma: float) -> np.ndarray:
    g = np.array(
        [math.exp(-((x - window_size // 2) ** 2) / float(2 * sigma ** 2))
         for x in range(window_size)],
        dtype=np.float64,
    )
    return (g / g.sum()).astype(np.float32)


def _toeplitz_conv_matrix(n: int, g: np.ndarray) -> np.ndarray:
    """Banded (n, n) matrix T with T[i, j] = g[j - i + p] (zero-padded conv).

    T @ X applies the zero-padded 1D Gaussian along rows (vertical conv);
    X @ T applies it along columns (valid because the Gaussian is symmetric).
    """
    ws = len(g)
    p = ws // 2
    idx = np.arange(n)
    d = idx[None, :] - idx[:, None] + p          # j - i + p
    valid = (d >= 0) & (d < ws)
    t = np.where(valid, g[np.clip(d, 0, ws - 1)], np.float32(0.0))
    return t.astype(np.float32)


# ----------------------------------------------------------------------------
# Generation-aware VMEM budgeting
# ----------------------------------------------------------------------------
def _vmem_capacity_bytes() -> int:
    """Physical per-core VMEM (v5e/v6e: 128 MiB, v7x: 64 MiB); safe fallback."""
    try:
        info = pltpu.get_tpu_info()
        cap = getattr(info, "vmem_capacity_bytes", None)
        if cap:
            return int(cap)
    except Exception:
        pass
    return 64 * 1024 * 1024  # conservative default (v7x per-TC size)


# Rough peak live bytes per image pixel inside one grid step:
#   2 f32 inputs double-buffered (16) + bf16 stat slabs (10) + conv outputs /
#   epilogue f32 slabs (~50) + slack.
_BYTES_PER_IMG_PIXEL = 96


def _choose_images_per_step(n_images: int, H: int, W: int,
                            budget_bytes: int) -> int:
    """Largest divisor of n_images fitting the VMEM budget.

    Capped at n_images // 2 so the grid keeps >= 2 parallel steps (v7x has
    two TensorCores; a single fat step would leave one of them idle).
    """
    max_k = n_images if n_images < 2 else max(1, n_images // 2)
    best = 1
    for k in range(1, max_k + 1):
        if n_images % k:
            continue
        est = _BYTES_PER_IMG_PIXEL * k * H * W + 4 * (H * H + W * W)
        if est <= budget_bytes:
            best = k
    return best


# ----------------------------------------------------------------------------
# Kernel
# ----------------------------------------------------------------------------
def _ssim_kernel(gv_ref, gw_ref, x1_ref, x2_ref, out_ref):
    """One grid step processes k images stacked along sublanes.

    gv_ref  : (H, H)        vertical Gaussian Toeplitz (bf16)
    gw_ref  : (W, W)        horizontal Gaussian Toeplitz (bf16, symmetric)
    x1_ref  : (1, k, H, W)  f32 images
    x2_ref  : (1, k, H, W)
    out_ref : (1, 1, W)     per-column partial sums of the SSIM map
    """
    k = x1_ref.shape[1]
    H = x1_ref.shape[2]
    W = x1_ref.shape[3]
    G = 5 * k

    x1 = x1_ref[0]                       # (k, H, W) f32
    x2 = x2_ref[0]
    gv = gv_ref[...]                     # (H, H) bf16
    gw = gw_ref[...]                     # (W, W) bf16

    def mx(v):
        return v.astype(jnp.bfloat16)

    # Stack all five conv inputs along sublanes: (5k, H, W) bf16.
    stats = jnp.concatenate(
        [mx(x1), mx(x2), mx(x1 * x1), mx(x2 * x2), mx(x1 * x2)], axis=0)

    # Horizontal Gaussian conv: ONE fat MXU matmul over 5*k*H rows.
    h = jnp.dot(stats.reshape(G * H, W), gw,
                preferred_element_type=jnp.float32)            # (G*H, W) f32
    hb = h.astype(jnp.bfloat16).reshape(G, H, W)

    # Vertical Gaussian conv: single batched MXU matmul (gv shared over G).
    gvb = jnp.broadcast_to(gv.reshape(1, H, H), (G, H, H))
    c = jnp.einsum('ghd,gdw->ghw', gvb, hb,
                   preferred_element_type=jnp.float32)         # (G, H, W) f32

    mu1 = c[0 * k:1 * k]
    mu2 = c[1 * k:2 * k]
    e11 = c[2 * k:3 * k]
    e22 = c[3 * k:4 * k]
    e12 = c[4 * k:5 * k]

    mu1_sq = mu1 * mu1
    mu2_sq = mu2 * mu2
    mu1_mu2 = mu1 * mu2

    C1 = 0.01 ** 2
    C2 = 0.03 ** 2

    # Fused numerator/denominator (fewer live (k,H,W) slabs).
    num = (2.0 * mu1_mu2 + C1) * (2.0 * (e12 - mu1_mu2) + C2)
    den = (mu1_sq + mu2_sq + C1) * ((e11 - mu1_sq) + (e22 - mu2_sq) + C2)
    ssim_map = num * pl.reciprocal(den, approx=True)           # (k, H, W) f32

    # Per-column partial sums; cross-step/lane reduce + divide in the wrapper.
    col = jnp.sum(jnp.sum(ssim_map, axis=0), axis=0, keepdims=True)  # (1, W)
    out_ref[0] = col


# ----------------------------------------------------------------------------
# Wrapper
# ----------------------------------------------------------------------------
def ssim_pallas(img1, img2, window_size: int = 11, sigma: float = 1.5):
    """SSIM(img1, img2) with size_average=True.  Inputs are NCHW."""
    assert img1.shape == img2.shape
    B, C, H, W = img1.shape
    n_images = B * C

    g = _gaussian_1d(window_size, sigma)
    gv = jnp.asarray(_toeplitz_conv_matrix(H, g), dtype=jnp.bfloat16)  # (H, H)
    gw = jnp.asarray(_toeplitz_conv_matrix(W, g), dtype=jnp.bfloat16)  # (W, W)

    # One capacity number drives both the step-size chooser and the compiler
    # VMEM limit (generation-aware: 128 MiB on v5e/v6e, 64 MiB on v7x).
    cap = _vmem_capacity_bytes()
    vmem_limit = max(16 * 1024 * 1024,
                     min(cap * 3 // 4, cap - 8 * 1024 * 1024))
    budget = vmem_limit // 2

    k = _choose_images_per_step(n_images, H, W, budget)
    n_steps = n_images // k

    # Free reshapes only (no transpose, no dtype round trip through HBM).
    x1 = img1.astype(jnp.float32).reshape(n_steps, k, H, W)
    x2 = img2.astype(jnp.float32).reshape(n_steps, k, H, W)

    def build(use_buffered_consts: bool):
        const_kwargs = (
            dict(pipeline_mode=pl.Buffered(1)) if use_buffered_consts else {})
        return pl.pallas_call(
            _ssim_kernel,
            out_shape=jax.ShapeDtypeStruct((n_steps, 1, W), jnp.float32),
            grid=(n_steps,),
            in_specs=[
                pl.BlockSpec((H, H), lambda i: (0, 0), **const_kwargs),
                pl.BlockSpec((W, W), lambda i: (0, 0), **const_kwargs),
                pl.BlockSpec((1, k, H, W), lambda i: (i, 0, 0, 0)),
                pl.BlockSpec((1, k, H, W), lambda i: (i, 0, 0, 0)),
            ],
            out_specs=pl.BlockSpec((1, 1, W), lambda i: (i, 0, 0)),
            compiler_params=pltpu.CompilerParams(
                dimension_semantics=("parallel",),
                vmem_limit_bytes=int(vmem_limit),
            ),
        )

    try:
        partial = build(True)(gv, gw, x1, x2)
    except Exception:
        # Fallback if single-buffered constant operands are unsupported.
        partial = build(False)(gv, gw, x1, x2)

    total = float(n_images * H * W)
    return jnp.sum(partial) * jnp.float32(1.0 / total)


# ----------------------------------------------------------------------------
# Pure-JAX reference (mirrors _ssim in the PyTorch module) for a sanity check.
# ----------------------------------------------------------------------------
def _ssim_reference(img1, img2, window_size: int = 11, sigma: float = 1.5):
    g = _gaussian_1d(window_size, sigma)
    w2d = np.outer(g, g)                                             # (ws, ws)
    B, C, H, W = img1.shape
    p = window_size // 2

    def conv(x):
        xp = jnp.pad(x, ((0, 0), (0, 0), (p, p), (p, p)))
        out = jnp.zeros_like(x)
        for u in range(window_size):
            for v in range(window_size):
                out = out + float(w2d[u, v]) * xp[:, :, u:u + H, v:v + W]
        return out

    x1 = img1.astype(jnp.float32)
    x2 = img2.astype(jnp.float32)
    mu1, mu2 = conv(x1), conv(x2)
    mu1_sq, mu2_sq, mu1_mu2 = mu1 * mu1, mu2 * mu2, mu1 * mu2
    s1 = conv(x1 * x1) - mu1_sq
    s2 = conv(x2 * x2) - mu2_sq
    s12 = conv(x1 * x2) - mu1_mu2
    C1, C2 = 0.01 ** 2, 0.03 ** 2
    ssim_map = ((2 * mu1_mu2 + C1) * (2 * s12 + C2)) / (
        (mu1_sq + mu2_sq + C1) * (s1 + s2 + C2))
    return jnp.mean(ssim_map)


if __name__ == "__main__":
    key = jax.random.PRNGKey(0)
    k1, k2 = jax.random.split(key)

    # Small NCHW inputs consistent with the module's forward (values in [0,1]).
    B, C, H, W = 2, 4, 16, 16
    img1 = jax.random.uniform(k1, (B, C, H, W), dtype=jnp.float32)
    img2 = jax.random.uniform(k2, (B, C, H, W), dtype=jnp.float32)

    result = ssim_pallas(img1, img2)
    result = jax.block_until_ready(result)

    ref = jax.block_until_ready(_ssim_reference(img1, img2))
    # bf16 MXU operands + approx reciprocal stay well within this tolerance.
    assert abs(float(result) - float(ref)) < 5e-3, (float(result), float(ref))

    print("KERNEL_OK")
</pallas_src>

<mosaic_0001>
module attributes {stable_mosaic.version = 11 : i64} {
  func.func @_ssim_kernel(%arg0: i32, %arg1: memref<16x16xbf16, #tpu.memory_space<vmem>>, %arg2: memref<16x16xbf16, #tpu.memory_space<vmem>>, %arg3: memref<1x4x16x16xf32, #tpu.memory_space<vmem>>, %arg4: memref<1x4x16x16xf32, #tpu.memory_space<vmem>>, %arg5: memref<1x1x16xf32, #tpu.memory_space<vmem>>) attributes {dimension_semantics = [#tpu.dimension_semantics<parallel>], iteration_bounds = array<i64: 2>, scalar_prefetch = 0 : i64, scratch_operands = 0 : i64, tpu.core_type = #tpu.core_type<tc>, window_params = [{pipeline_mode = #tpu.pipeline_mode<synchronous>, transform_indices = @transform_0, window_bounds = array<i64: 16, 16>}, {pipeline_mode = #tpu.pipeline_mode<synchronous>, transform_indices = @transform_1, window_bounds = array<i64: 16, 16>}, {transform_indices = @transform_2, window_bounds = array<i64: 1, 4, 16, 16>}, {transform_indices = @transform_3, window_bounds = array<i64: 1, 4, 16, 16>}, {transform_indices = @transform_4, window_bounds = array<i64: 1, 1, 16>}]} {
    %c0 = arith.constant 0 : index
    %c0_0 = arith.constant 0 : index
    %c0_1 = arith.constant 0 : index
    %c0_2 = arith.constant 0 : index
    %0 = vector.load %arg3[%c0, %c0_0, %c0_1, %c0_2] : memref<1x4x16x16xf32, #tpu.memory_space<vmem>>, vector<1x4x16x16xf32>
    %1 = vector.shape_cast %0 : vector<1x4x16x16xf32> to vector<4x16x16xf32>
    %c0_3 = arith.constant 0 : index
    %c0_4 = arith.constant 0 : index
    %c0_5 = arith.constant 0 : index
    %c0_6 = arith.constant 0 : index
    %2 = vector.load %arg4[%c0_3, %c0_4, %c0_5, %c0_6] : memref<1x4x16x16xf32, #tpu.memory_space<vmem>>, vector<1x4x16x16xf32>
    %3 = vector.shape_cast %2 : vector<1x4x16x16xf32> to vector<4x16x16xf32>
    %c0_7 = arith.constant 0 : index
    %c0_8 = arith.constant 0 : index
    %4 = vector.load %arg1[%c0_7, %c0_8] : memref<16x16xbf16, #tpu.memory_space<vmem>>, vector<16x16xbf16>
    %c0_9 = arith.constant 0 : index
    %c0_10 = arith.constant 0 : index
    %5 = vector.load %arg2[%c0_9, %c0_10] : memref<16x16xbf16, #tpu.memory_space<vmem>>, vector<16x16xbf16>
    %6 = arith.truncf %1 : vector<4x16x16xf32> to vector<4x16x16xbf16>
    %7 = arith.truncf %3 : vector<4x16x16xf32> to vector<4x16x16xbf16>
    %8 = arith.mulf %1, %1 : vector<4x16x16xf32>
    %9 = arith.truncf %8 : vector<4x16x16xf32> to vector<4x16x16xbf16>
    %10 = arith.mulf %3, %3 : vector<4x16x16xf32>
    %11 = arith.truncf %10 : vector<4x16x16xf32> to vector<4x16x16xbf16>
    %12 = arith.mulf %1, %3 : vector<4x16x16xf32>
    %13 = arith.truncf %12 : vector<4x16x16xf32> to vector<4x16x16xbf16>
    %14 = tpu.concatenate %6, %7, %9, %11, %13 in 0 : vector<4x16x16xbf16>, vector<4x16x16xbf16>, vector<4x16x16xbf16>, vector<4x16x16xbf16>, vector<4x16x16xbf16> -> vector<20x16x16xbf16>
    %15 = vector.shape_cast %14 : vector<20x16x16xbf16> to vector<320x16xbf16>
    %cst = arith.constant dense<0.000000e+00> : vector<320x16xf32>
    %16 = tpu.matmul %15, %5, %cst {dimension_numbers = #tpu.dot_dimension_numbers<[1], [0], [0], [1], [0, 0, 1, 1], [], []>} : vector<320x16xbf16>, vector<16x16xbf16>, vector<320x16xf32> -> vector<320x16xf32>
    %17 = arith.truncf %16 : vector<320x16xf32> to vector<320x16xbf16>
    %18 = vector.shape_cast %17 : vector<320x16xbf16> to vector<20x16x16xbf16>
    %19 = vector.shape_cast %4 : vector<16x16xbf16> to vector<1x16x16xbf16>
    %20 = vector.shape_cast %19 : vector<1x16x16xbf16> to vector<1x16x16xbf16>
    %21 = vector.broadcast %20 : vector<1x16x16xbf16> to vector<20x16x16xbf16>
    "tpu.trace_start"() <{level = 10 : i32, message = "ghd,gdw->ghw"}> : () -> ()
    %cst_11 = arith.constant dense<0.000000e+00> : vector<20x16x16xf32>
    %22 = tpu.matmul %21, %18, %cst_11 {dimension_numbers = #tpu.dot_dimension_numbers<[2], [1], [1], [2], [0, 0, 0, 1, 1, 2], [0], [0]>} : vector<20x16x16xbf16>, vector<20x16x16xbf16>, vector<20x16x16xf32> -> vector<20x16x16xf32>
    "tpu.trace_stop"() : () -> ()
    %23 = vector.extract_strided_slice %22 {offsets = [0, 0, 0], sizes = [4, 16, 16], strides = [1, 1, 1]} : vector<20x16x16xf32> to vector<4x16x16xf32>
    %24 = vector.extract_strided_slice %22 {offsets = [4, 0, 0], sizes = [4, 16, 16], strides = [1, 1, 1]} : vector<20x16x16xf32> to vector<4x16x16xf32>
    %25 = vector.extract_strided_slice %22 {offsets = [8, 0, 0], sizes = [4, 16, 16], strides = [1, 1, 1]} : vector<20x16x16xf32> to vector<4x16x16xf32>
    %26 = vector.extract_strided_slice %22 {offsets = [12, 0, 0], sizes = [4, 16, 16], strides = [1, 1, 1]} : vector<20x16x16xf32> to vector<4x16x16xf32>
    %27 = vector.extract_strided_slice %22 {offsets = [16, 0, 0], sizes = [4, 16, 16], strides = [1, 1, 1]} : vector<20x16x16xf32> to vector<4x16x16xf32>
    %28 = arith.mulf %23, %23 : vector<4x16x16xf32>
    %29 = arith.mulf %24, %24 : vector<4x16x16xf32>
    %30 = arith.mulf %23, %24 : vector<4x16x16xf32>
    %cst_12 = arith.constant 2.000000e+00 : f32
    %31 = vector.broadcast %cst_12 : f32 to vector<4x16x16xf32>
    %32 = arith.mulf %31, %30 : vector<4x16x16xf32>
    %cst_13 = arith.constant 9.99999974E-5 : f32
    %33 = vector.broadcast %cst_13 : f32 to vector<4x16x16xf32>
    %34 = arith.addf %32, %33 : vector<4x16x16xf32>
    %35 = arith.subf %27, %30 : vector<4x16x16xf32>
    %cst_14 = arith.constant 2.000000e+00 : f32
    %36 = vector.broadcast %cst_14 : f32 to vector<4x16x16xf32>
    %37 = arith.mulf %36, %35 : vector<4x16x16xf32>
    %cst_15 = arith.constant 8.99999984E-4 : f32
    %38 = vector.broadcast %cst_15 : f32 to vector<4x16x16xf32>
    %39 = arith.addf %37, %38 : vector<4x16x16xf32>
    %40 = arith.mulf %34, %39 : vector<4x16x16xf32>
    %41 = arith.addf %28, %29 : vector<4x16x16xf32>
    %cst_16 = arith.constant 9.99999974E-5 : f32
    %42 = vector.broadcast %cst_16 : f32 to vector<4x16x16xf32>
    %43 = arith.addf %41, %42 : vector<4x16x16xf32>
    %44 = arith.subf %25, %28 : vector<4x16x16xf32>
    %45 = arith.subf %26, %29 : vector<4x16x16xf32>
    %46 = arith.addf %44, %45 : vector<4x16x16xf32>
    %cst_17 = arith.constant 8.99999984E-4 : f32
    %47 = vector.broadcast %cst_17 : f32 to vector<4x16x16xf32>
    %48 = arith.addf %46, %47 : vector<4x16x16xf32>
    %49 = arith.mulf %43, %48 : vector<4x16x16xf32>
    %50 = tpu.reciprocal %49 {approx = true} : vector<4x16x16xf32> -> vector<4x16x16xf32>
    %51 = arith.mulf %40, %50 : vector<4x16x16xf32>
    %cst_18 = arith.constant dense<0.000000e+00> : vector<16x16xf32>
    %52 = vector.multi_reduction <add>, %51, %cst_18 [0] : vector<4x16x16xf32> to vector<16x16xf32>
    %cst_19 = arith.constant dense<0.000000e+00> : vector<16xf32>
    %53 = vector.multi_reduction <add>, %52, %cst_19 [0] : vector<16x16xf32> to vector<16xf32>
    %54 = vector.shape_cast %53 : vector<16xf32> to vector<1x16xf32>
    %c0_20 = arith.constant 0 : index
    %c0_21 = arith.constant 0 : index
    %c0_22 = arith.constant 0 : index
    %55 = vector.load %arg5[%c0_20, %c0_21, %c0_22] : memref<1x1x16xf32, #tpu.memory_space<vmem>>, vector<1x1x16xf32>
    %56 = vector.shape_cast %55 : vector<1x1x16xf32> to vector<1x16xf32>
    %57 = vector.shape_cast %54 : vector<1x16xf32> to vector<1x1x16xf32>
    tpu.vector_store %arg5[%c0_20, %c0_21, %c0_22], %57 {strides = array<i32>} : memref<1x1x16xf32, #tpu.memory_space<vmem>>, vector<1x1x16xf32>,
    return
  }
  func.func @transform_0(%arg0: i32) -> (i32, i32) {
    %c0_i32 = arith.constant 0 : i32
    %c0_i32_0 = arith.constant 0 : i32
    %c0_i32_1 = arith.constant 0 : i32
    return %c0_i32, %c0_i32_0 : i32, i32
  }
  func.func @transform_1(%arg0: i32) -> (i32, i32) {
    %c0_i32 = arith.constant 0 : i32
    %c0_i32_0 = arith.constant 0 : i32
    %c0_i32_1 = arith.constant 0 : i32
    return %c0_i32, %c0_i32_0 : i32, i32
  }
  func.func @transform_2(%arg0: i32) -> (i32, i32, i32, i32) {
    %c0_i32 = arith.constant 0 : i32
    %c0_i32_0 = arith.constant 0 : i32
    %c0_i32_1 = arith.constant 0 : i32
    %c0_i32_2 = arith.constant 0 : i32
    return %arg0, %c0_i32, %c0_i32_0, %c0_i32_1 : i32, i32, i32, i32
  }
  func.func @transform_3(%arg0: i32) -> (i32, i32, i32, i32) {
    %c0_i32 = arith.constant 0 : i32
    %c0_i32_0 = arith.constant 0 : i32
    %c0_i32_1 = arith.constant 0 : i32
    %c0_i32_2 = arith.constant 0 : i32
    return %arg0, %c0_i32, %c0_i32_0, %c0_i32_1 : i32, i32, i32, i32
  }
  func.func @transform_4(%arg0: i32) -> (i32, i32, i32) {
    %c0_i32 = arith.constant 0 : i32
    %c0_i32_0 = arith.constant 0 : i32
    %c0_i32_1 = arith.constant 0 : i32
    return %arg0, %c0_i32, %c0_i32_0 : i32, i32, i32
  }
}

module attributes {stable_mosaic.version = 11 : i64} {
  func.func @_ssim_kernel(%arg0: i32, %arg1: memref<16x16xbf16, #tpu.memory_space<vmem>>, %arg2: memref<16x16xbf16, #tpu.memory_space<vmem>>, %arg3: memref<1x4x16x16xf32, #tpu.memory_space<vmem>>, %arg4: memref<1x4x16x16xf32, #tpu.memory_space<vmem>>, %arg5: memref<1x1x16xf32, #tpu.memory_space<vmem>>) attributes {dimension_semantics = [#tpu.dimension_semantics<parallel>], iteration_bounds = array<i64: 2>, scalar_prefetch = 0 : i64, scratch_operands = 0 : i64, tpu.core_type = #tpu.core_type<tc>, window_params = [{pipeline_mode = #tpu.pipeline_mode<synchronous>, transform_indices = @transform_0, window_bounds = array<i64: 16, 16>}, {pipeline_mode = #tpu.pipeline_mode<synchronous>, transform_indices = @transform_1, window_bounds = array<i64: 16, 16>}, {transform_indices = @transform_2, window_bounds = array<i64: 1, 4, 16, 16>}, {transform_indices = @transform_3, window_bounds = array<i64: 1, 4, 16, 16>}, {transform_indices = @transform_4, window_bounds = array<i64: 1, 1, 16>}]} {
    %c0 = arith.constant 0 : index
    %c0_0 = arith.constant 0 : index
    %c0_1 = arith.constant 0 : index
    %c0_2 = arith.constant 0 : index
    %0 = vector.load %arg3[%c0, %c0_0, %c0_1, %c0_2] : memref<1x4x16x16xf32, #tpu.memory_space<vmem>>, vector<1x4x16x16xf32>
    %1 = vector.shape_cast %0 : vector<1x4x16x16xf32> to vector<4x16x16xf32>
    %c0_3 = arith.constant 0 : index
    %c0_4 = arith.constant 0 : index
    %c0_5 = arith.constant 0 : index
    %c0_6 = arith.constant 0 : index
    %2 = vector.load %arg4[%c0_3, %c0_4, %c0_5, %c0_6] : memref<1x4x16x16xf32, #tpu.memory_space<vmem>>, vector<1x4x16x16xf32>
    %3 = vector.shape_cast %2 : vector<1x4x16x16xf32> to vector<4x16x16xf32>
    %c0_7 = arith.constant 0 : index
    %c0_8 = arith.constant 0 : index
    %4 = vector.load %arg1[%c0_7, %c0_8] : memref<16x16xbf16, #tpu.memory_space<vmem>>, vector<16x16xbf16>
    %c0_9 = arith.constant 0 : index
    %c0_10 = arith.constant 0 : index
    %5 = vector.load %arg2[%c0_9, %c0_10] : memref<16x16xbf16, #tpu.memory_space<vmem>>, vector<16x16xbf16>
    %6 = arith.truncf %1 : vector<4x16x16xf32> to vector<4x16x16xbf16>
    %7 = arith.truncf %3 : vector<4x16x16xf32> to vector<4x16x16xbf16>
    %8 = arith.mulf %1, %1 : vector<4x16x16xf32>
    %9 = arith.truncf %8 : vector<4x16x16xf32> to vector<4x16x16xbf16>
    %10 = arith.mulf %3, %3 : vector<4x16x16xf32>
    %11 = arith.truncf %10 : vector<4x16x16xf32> to vector<4x16x16xbf16>
    %12 = arith.mulf %1, %3 : vector<4x16x16xf32>
    %13 = arith.truncf %12 : vector<4x16x16xf32> to vector<4x16x16xbf16>
    %14 = tpu.concatenate %6, %7, %9, %11, %13 in 0 : vector<4x16x16xbf16>, vector<4x16x16xbf16>, vector<4x16x16xbf16>, vector<4x16x16xbf16>, vector<4x16x16xbf16> -> vector<20x16x16xbf16>
    %15 = vector.shape_cast %14 : vector<20x16x16xbf16> to vector<320x16xbf16>
    %cst = arith.constant dense<0.000000e+00> : vector<320x16xf32>
    %16 = tpu.matmul %15, %5, %cst {dimension_numbers = #tpu.dot_dimension_numbers<[1], [0], [0], [1], [0, 0, 1, 1], [], []>} : vector<320x16xbf16>, vector<16x16xbf16>, vector<320x16xf32> -> vector<320x16xf32>
    %17 = arith.truncf %16 : vector<320x16xf32> to vector<320x16xbf16>
    %18 = vector.shape_cast %17 : vector<320x16xbf16> to vector<20x16x16xbf16>
    %19 = vector.shape_cast %4 : vector<16x16xbf16> to vector<1x16x16xbf16>
    %20 = vector.shape_cast %19 : vector<1x16x16xbf16> to vector<1x16x16xbf16>
    %21 = vector.broadcast %20 : vector<1x16x16xbf16> to vector<20x16x16xbf16>
    "tpu.trace_start"() <{level = 10 : i32, message = "ghd,gdw->ghw"}> : () -> ()
    %cst_11 = arith.constant dense<0.000000e+00> : vector<20x16x16xf32>
    %22 = tpu.matmul %21, %18, %cst_11 {dimension_numbers = #tpu.dot_dimension_numbers<[2], [1], [1], [2], [0, 0, 0, 1, 1, 2], [0], [0]>} : vector<20x16x16xbf16>, vector<20x16x16xbf16>, vector<20x16x16xf32> -> vector<20x16x16xf32>
    "tpu.trace_stop"() : () -> ()
    %23 = vector.extract_strided_slice %22 {offsets = [0, 0, 0], sizes = [4, 16, 16], strides = [1, 1, 1]} : vector<20x16x16xf32> to vector<4x16x16xf32>
    %24 = vector.extract_strided_slice %22 {offsets = [4, 0, 0], sizes = [4, 16, 16], strides = [1, 1, 1]} : vector<20x16x16xf32> to vector<4x16x16xf32>
    %25 = vector.extract_strided_slice %22 {offsets = [8, 0, 0], sizes = [4, 16, 16], strides = [1, 1, 1]} : vector<20x16x16xf32> to vector<4x16x16xf32>
    %26 = vector.extract_strided_slice %22 {offsets = [12, 0, 0], sizes = [4, 16, 16], strides = [1, 1, 1]} : vector<20x16x16xf32> to vector<4x16x16xf32>
    %27 = vector.extract_strided_slice %22 {offsets = [16, 0, 0], sizes = [4, 16, 16], strides = [1, 1, 1]} : vector<20x16x16xf32> to vector<4x16x16xf32>
    %28 = arith.mulf %23, %23 : vector<4x16x16xf32>
    %29 = arith.mulf %24, %24 : vector<4x16x16xf32>
    %30 = arith.mulf %23, %24 : vector<4x16x16xf32>
    %cst_12 = arith.constant 2.000000e+00 : f32
    %31 = vector.broadcast %cst_12 : f32 to vector<4x16x16xf32>
    %32 = arith.mulf %31, %30 : vector<4x16x16xf32>
    %cst_13 = arith.constant 9.99999974E-5 : f32
    %33 = vector.broadcast %cst_13 : f32 to vector<4x16x16xf32>
    %34 = arith.addf %32, %33 : vector<4x16x16xf32>
    %35 = arith.subf %27, %30 : vector<4x16x16xf32>
    %cst_14 = arith.constant 2.000000e+00 : f32
    %36 = vector.broadcast %cst_14 : f32 to vector<4x16x16xf32>
    %37 = arith.mulf %36, %35 : vector<4x16x16xf32>
    %cst_15 = arith.constant 8.99999984E-4 : f32
    %38 = vector.broadcast %cst_15 : f32 to vector<4x16x16xf32>
    %39 = arith.addf %37, %38 : vector<4x16x16xf32>
    %40 = arith.mulf %34, %39 : vector<4x16x16xf32>
    %41 = arith.addf %28, %29 : vector<4x16x16xf32>
    %cst_16 = arith.constant 9.99999974E-5 : f32
    %42 = vector.broadcast %cst_16 : f32 to vector<4x16x16xf32>
    %43 = arith.addf %41, %42 : vector<4x16x16xf32>
    %44 = arith.subf %25, %28 : vector<4x16x16xf32>
    %45 = arith.subf %26, %29 : vector<4x16x16xf32>
    %46 = arith.addf %44, %45 : vector<4x16x16xf32>
    %cst_17 = arith.constant 8.99999984E-4 : f32
    %47 = vector.broadcast %cst_17 : f32 to vector<4x16x16xf32>
    %48 = arith.addf %46, %47 : vector<4x16x16xf32>
    %49 = arith.mulf %43, %48 : vector<4x16x16xf32>
    %50 = tpu.reciprocal %49 {approx = true} : vector<4x16x16xf32> -> vector<4x16x16xf32>
    %51 = arith.mulf %40, %50 : vector<4x16x16xf32>
    %cst_18 = arith.constant dense<0.000000e+00> : vector<16x16xf32>
    %52 = vector.multi_reduction <add>, %51, %cst_18 [0] : vector<4x16x16xf32> to vector<16x16xf32>
    %cst_19 = arith.constant dense<0.000000e+00> : vector<16xf32>
    %53 = vector.multi_reduction <add>, %52, %cst_19 [0] : vector<16x16xf32> to vector<16xf32>
    %54 = vector.shape_cast %53 : vector<16xf32> to vector<1x16xf32>
    %c0_20 = arith.constant 0 : index
    %c0_21 = arith.constant 0 : index
    %c0_22 = arith.constant 0 : index
    %55 = vector.load %arg5[%c0_20, %c0_21, %c0_22] : memref<1x1x16xf32, #tpu.memory_space<vmem>>, vector<1x1x16xf32>
    %56 = vector.shape_cast %55 : vector<1x1x16xf32> to vector<1x16xf32>
    %57 = vector.shape_cast %54 : vector<1x16xf32> to vector<1x1x16xf32>
    tpu.vector_store %arg5[%c0_20, %c0_21, %c0_22], %57 {strides = array<i32>} : memref<1x1x16xf32, #tpu.memory_space<vmem>>, vector<1x1x16xf32>,
    return
  }
  func.func @transform_0(%arg0: i32) -> (i32, i32) {
    %c0_i32 = arith.constant 0 : i32
    %c0_i32_0 = arith.constant 0 : i32
    %c0_i32_1 = arith.constant 0 : i32
    return %c0_i32, %c0_i32_0 : i32, i32
  }
  func.func @transform_1(%arg0: i32) -> (i32, i32) {
    %c0_i32 = arith.constant 0 : i32
    %c0_i32_0 = arith.constant 0 : i32
    %c0_i32_1 = arith.constant 0 : i32
    return %c0_i32, %c0_i32_0 : i32, i32
  }
  func.func @transform_2(%arg0: i32) -> (i32, i32, i32, i32) {
    %c0_i32 = arith.constant 0 : i32
    %c0_i32_0 = arith.constant 0 : i32
    %c0_i32_1 = arith.constant 0 : i32
    %c0_i32_2 = arith.constant 0 : i32
    return %arg0, %c0_i32, %c0_i32_0, %c0_i32_1 : i32, i32, i32, i32
  }
  func.func @transform_3(%arg0: i32) -> (i32, i32, i32, i32) {
    %c0_i32 = arith.constant 0 : i32
    %c0_i32_0 = arith.constant 0 : i32
    %c0_i32_1 = arith.constant 0 : i32
    %c0_i32_2 = arith.constant 0 : i32
    return %arg0, %c0_i32, %c0_i32_0, %c0_i32_1 : i32, i32, i32, i32
  }
  func.func @transform_4(%arg0: i32) -> (i32, i32, i32) {
    %c0_i32 = arith.constant 0 : i32
    %c0_i32_0 = arith.constant 0 : i32
    %c0_i32_1 = arith.constant 0 : i32
    return %arg0, %c0_i32, %c0_i32_0 : i32, i32, i32
  }
}

</mosaic_0001>

<llo_original>
// kernel: tpu_custom_call.1
$region0: #{tpu_custom_call.1}
  #allocation0 [shape = 'u32[]', space=smem, size = 0x4, offset = 0x4, fixed_abs, tag = 'smem constant byte address 0x4 - core index']
  #allocation1 [shape = 'u32[72,128]{1,0:T(1,128)}', space=vmem, size = 0x9000, scoped, tag = 'internal scratch']
  %s0 = inlined_call_operand.hbm [shape: bf16[16,16], index: 0, kind: input, shape index: {}]
  %s1 = inlined_call_operand.hbm [shape: bf16[16,16], index: 1, kind: input, shape index: {}]
  %s2 = inlined_call_operand.hbm [shape: f32[2,4,16,16], index: 2, kind: input, shape index: {}]
  %s3 = inlined_call_operand.hbm [shape: f32[2,4,16,16], index: 3, kind: input, shape index: {}]
  %s4 = inlined_call_operand.hbm [shape: f32[2,1,16], index: 4, kind: output, shape index: {}]
  %s5 = sld [smem:[#allocation0]]
  $region65: #{tpu_custom_call.1} parent=0
    _
  %s7 = ssub.s32 1, %s5
  %s8 = scalar_select 0, %s7, %s5
  $region1: #{tpu_custom_call.1} parent=0
    #allocation2 [shape = 'u8[4096]{0}', space=vmem, size = 0x1000, scoped, tag = 'input window, operand 0, single buffered']
    #allocation3 [shape = 's32[2]{0}', space=sflag, size = 0x8, scoped, tag = 'scoped memory for tpu_custom_call.1']
    #allocation4 [shape = 's32[2]{0}', space=sflag, size = 0x8, scoped, tag = 'scoped memory for tpu_custom_call.1']
    #allocation5 [shape = 'u8[4096]{0}', space=vmem, size = 0x1000, scoped, tag = 'input window, operand 1, single buffered']
    #allocation6 [shape = 's32[1]{0}', space=sflag, size = 0x4, scoped, tag = 'scoped memory for tpu_custom_call.1']
    #allocation7 [shape = 'u8[65536]{0}', space=vmem, size = 0x10000, scoped, tag = 'input window, operand 2']
    #allocation8 [shape = 'u8[65536]{0}', space=vmem, size = 0x10000, scoped, tag = 'input window, operand 3']
    #allocation9 [shape = 'u8[1024]{0}', space=vmem, size = 0x400, scoped, tag = 'output window, operand 0']
    %9 = vsyncpa [#allocation3], 0
    %10 = vsyncpa [#allocation6], 0
    %11 = vsyncpa [#allocation4], 0
    %s12 = scalar_lea.sflag [#allocation4], 1
    %13 = vsyncpa %s12, 0
    loop: start=0, step=1, limit=4
    $region2: #{tpu_custom_call.1} parent=1 // loop_pre_header
      _
    $region3: #{tpu_custom_call.1} parent=1 // loop_header
      %s15 = sphi 0, %s19
      %p16 = scmp.ge.s32.totalorder %s15, 4
      %s23 = sphi 0, %s23
      %s25 = sphi 0, %s23
      %s26 = sphi 0, %s25
      %s40 = sphi 0, %s26
      %s44 = sphi 0, %s44
      %s46 = sphi 0, %s44
      %s47 = sphi 0, %s46
      %s61 = sphi 0, %s47
      %s67 = sphi 0, %s69
      %s70 = sphi 0, %s67
      %s71 = sphi 0, %s70
      %s87 = sphi 0, %s71
      %s93 = sphi 0, %s95
      %s96 = sphi 0, %s93
      %s97 = sphi 0, %s96
      %s113 = sphi 0, %s97
      %s119 = sphi 0, %s121
      %s122 = sphi 0, %s119
      %s123 = sphi 0, %s122
      %s139 = sphi 0, %s123
    $region4: #{tpu_custom_call.1} parent=1 // loop_header_branch
      %18 = sbr.rel (%p16) target = $region8
    $region5: #{tpu_custom_call.1} parent=1 // loop_body
      %s20 = ssub.s32 %s15, 1
      %s21 = ssub.s32 %s15, 2
      %s22 = sadd.s32 %s15, 1
      %s24 = sadd.s32 %s23, 1
      %p27 = scmp.eq.s32.totalorder %s15, 1
      %p28 = scmp.ne.s32.totalorder %s23, %s25
      %p29 = scmp.eq.s32.totalorder %s15, 0
      %p30 = por %p28, %p29
      %p31 = scmp.ne.s32.totalorder %s23, %s25
      %p32 = scmp.eq.s32.totalorder %s20, 1
      %p33 = por %p31, %p32
      %p34 = scmp.ne.s32.totalorder %s25, %s26
      %p35 = scmp.eq.s32.totalorder %s20, 0
      %p36 = por %p34, %p35
      %p37 = scmp.ne.s32.totalorder %s25, %s26
      %p38 = scmp.eq.s32.totalorder %s21, 1
      %p39 = por %p37, %p38
      %p41 = scmp.ne.s32.totalorder %s26, %s40
      %p42 = scmp.eq.s32.totalorder %s21, 0
      %p43 = por %p41, %p42
      %s45 = sadd.s32 %s44, 1
      %p48 = scmp.eq.s32.totalorder %s15, 1
      %p49 = scmp.ne.s32.totalorder %s44, %s46
      %p50 = scmp.eq.s32.totalorder %s15, 0
      %p51 = por %p49, %p50
      %p52 = scmp.ne.s32.totalorder %s44, %s46
      %p53 = scmp.eq.s32.totalorder %s20, 1
      %p54 = por %p52, %p53
      %p55 = scmp.ne.s32.totalorder %s46, %s47
      %p56 = scmp.eq.s32.totalorder %s20, 0
      %p57 = por %p55, %p56
      %p58 = scmp.ne.s32.totalorder %s46, %s47
      %p59 = scmp.eq.s32.totalorder %s21, 1
      %p60 = por %p58, %p59
      %p62 = scmp.ne.s32.totalorder %s47, %s61
      %p63 = scmp.eq.s32.totalorder %s21, 0
      %p64 = por %p62, %p63
      %s65 = ssub.s32 %s15, %s22
      %p66 = scmp.eq.s32.totalorder %s65, 0
      %s68 = sadd.s32 %s67, 1
      %s69 = scalar_select %p66, %s67, %s68
      %p72 = pneg %p66
      %p73 = scmp.eq.s32.totalorder %s15, 1
      %p74 = por %p72, %p73
      %p75 = scmp.ne.s32.totalorder %s67, %s70
      %p76 = scmp.eq.s32.totalorder %s15, 0
      %p77 = por %p75, %p76
      %p78 = scmp.ne.s32.totalorder %s67, %s70
      %p79 = scmp.eq.s32.totalorder %s20, 1
      %p80 = por %p78, %p79
      %p81 = scmp.ne.s32.totalorder %s70, %s71
      %p82 = scmp.eq.s32.totalorder %s20, 0
      %p83 = por %p81, %p82
      %p84 = scmp.ne.s32.totalorder %s70, %s71
      %p85 = scmp.eq.s32.totalorder %s21, 1
      %p86 = por %p84, %p85
      %p88 = scmp.ne.s32.totalorder %s71, %s87
      %p89 = scmp.eq.s32.totalorder %s21, 0
      %p90 = por %p88, %p89
      %s91 = ssub.s32 %s15, %s22
      %p92 = scmp.eq.s32.totalorder %s91, 0
      %s94 = sadd.s32 %s93, 1
      %s95 = scalar_select %p92, %s93, %s94
      %p98 = pneg %p92
      %p99 = scmp.eq.s32.totalorder %s15, 1
      %p100 = por %p98, %p99
      %p101 = scmp.ne.s32.totalorder %s93, %s96
      %p102 = scmp.eq.s32.totalorder %s15, 0
      %p103 = por %p101, %p102
      %p104 = scmp.ne.s32.totalorder %s93, %s96
      %p105 = scmp.eq.s32.totalorder %s20, 1
      %p106 = por %p104, %p105
      %p107 = scmp.ne.s32.totalorder %s96, %s97
      %p108 = scmp.eq.s32.totalorder %s20, 0
      %p109 = por %p107, %p108
      %p110 = scmp.ne.s32.totalorder %s96, %s97
      %p111 = scmp.eq.s32.totalorder %s21, 1
      %p112 = por %p110, %p111
      %p114 = scmp.ne.s32.totalorder %s97, %s113
      %p115 = scmp.eq.s32.totalorder %s21, 0
      %p116 = por %p114, %p115
      %s117 = ssub.s32 %s15, %s22
      %p118 = scmp.eq.s32.totalorder %s117, 0
      %s120 = sadd.s32 %s119, 1
      %s121 = scalar_select %p118, %s119, %s120
      %p124 = pneg %p118
      %p125 = scmp.eq.s32.totalorder %s15, 1
      %p126 = por %p124, %p125
      %p127 = scmp.ne.s32.totalorder %s119, %s122
      %p128 = scmp.eq.s32.totalorder %s15, 0
      %p129 = por %p127, %p128
      %p130 = scmp.ne.s32.totalorder %s119, %s122
      %p131 = scmp.eq.s32.totalorder %s20, 1
      %p132 = por %p130, %p131
      %p133 = scmp.ne.s32.totalorder %s122, %s123
      %p134 = scmp.eq.s32.totalorder %s20, 0
      %p135 = por %p133, %p134
      %p136 = scmp.ne.s32.totalorder %s122, %s123
      %p137 = scmp.eq.s32.totalorder %s21, 1
      %p138 = por %p136, %p137
      %p140 = scmp.ne.s32.totalorder %s123, %s139
      %p141 = scmp.eq.s32.totalorder %s21, 0
      %p142 = por %p140, %p141
      %p143 = scmp.le.s32.totalorder 1, %s15
      %p144 = scmp.lt.s32.totalorder %s15, 3
      %p145 = pnand %p143, %p144
      %p146 = pneg %p145
      // Predicated region
      $region9: #{tpu_custom_call.1} parent=5 // pred_check
        _
      $region10: #{tpu_custom_call.1} parent=5 // pred_check_branch
        %148 = sbr.rel (%p145) target = $region12
      $region11: #{tpu_custom_call.1} parent=5 // pred_region
        %s149 = ssub.s32 %s15, 1
        // Predicated region
        $region13: #{tpu_custom_call.1} parent=11 // pred_check
          %p150 = pneg %p36
        $region14: #{tpu_custom_call.1} parent=11 // pred_check_branch
          %152 = sbr.rel (%p150) target = $region16
        $region15: #{tpu_custom_call.1} parent=11 // pred_region
          %154 = vsyncadd [#allocation3], 0
          %s155 = sshll.u32 %s0, 4
          %s156 = int_to_ptr.hbm [resolvable:$true] %s155
          %s157 = sshll.u32 [#allocation2], 4
          %s158 = int_to_ptr.vmem [resolvable:$true] %s157
          %163 = dma.hbm_to_vmem [thread:$0]  %s156, 128, %s158, [#allocation3], 64, 64, 4
        $region16: #{tpu_custom_call.1} parent=11 // pred_fallthru
          _
        // Predicated region
        $region17: #{tpu_custom_call.1} parent=11 // pred_check
          %p164 = pneg %p57
        $region18: #{tpu_custom_call.1} parent=11 // pred_check_branch
          %166 = sbr.rel (%p164) target = $region20
        $region19: #{tpu_custom_call.1} parent=11 // pred_region
          %168 = vsyncadd [#allocation6], 0
          %s169 = sshll.u32 %s1, 4
          %s170 = int_to_ptr.hbm [resolvable:$true] %s169
          %s171 = sshll.u32 [#allocation5], 4
          %s172 = int_to_ptr.vmem [resolvable:$true] %s171
          %177 = dma.hbm_to_vmem [thread:$0]  %s170, 128, %s172, [#allocation6], 64, 64, 4
        $region20: #{tpu_custom_call.1} parent=11 // pred_fallthru
          _
      $region12: #{tpu_custom_call.1} parent=5 // pred_fallthru
        _
      %p178 = scmp.lt.s32.totalorder %s15, 2
      // Predicated region
      $region21: #{tpu_custom_call.1} parent=5 // pred_check
        %p179 = pneg %p178
      $region22: #{tpu_custom_call.1} parent=5 // pred_check_branch
        %181 = sbr.rel (%p179) target = $region24
      $region23: #{tpu_custom_call.1} parent=5 // pred_region
        // Predicated region
        $region25: #{tpu_custom_call.1} parent=23 // pred_check
          %p182 = pneg %p77
        $region26: #{tpu_custom_call.1} parent=23 // pred_check_branch
          %184 = sbr.rel (%p182) target = $region28
        $region27: #{tpu_custom_call.1} parent=23 // pred_region
          %s185 = sand.u32 %s15, 1
          %s186 = scalar_lea.sflag [#allocation3], %s185
          %s187 = sand.u32 %s67, 1
          %s188 = smul.addr %s187, 64
          %s189 = scalar_lea.vmem [#allocation7], %s188
          %191 = vsyncadd %s186, 0
          %s192 = smul.addr %s15, 8
          %s193 = smul.addr %s192, 8
          %s194 = scalar_lea.hbm %s2, %s193
          %s195 = sshll.u32 %s194, 4
          %s196 = int_to_ptr.hbm [resolvable:$true] %s195
          %s197 = sshll.u32 %s189, 4
          %s198 = int_to_ptr.vmem [resolvable:$true] %s197
          %203 = dma.hbm_to_vmem [thread:$0]  %s196, 1024, %s198, %s186, 128, 128, 8
        $region28: #{tpu_custom_call.1} parent=23 // pred_fallthru
          _
        // Predicated region
        $region29: #{tpu_custom_call.1} parent=23 // pred_check
          %p204 = pneg %p103
        $region30: #{tpu_custom_call.1} parent=23 // pred_check_branch
          %206 = sbr.rel (%p204) target = $region32
        $region31: #{tpu_custom_call.1} parent=23 // pred_region
          %s207 = sand.u32 %s15, 1
          %s208 = scalar_lea.sflag [#allocation3], %s207
          %s209 = sand.u32 %s93, 1
          %s210 = smul.addr %s209, 64
          %s211 = scalar_lea.vmem [#allocation8], %s210
          %213 = vsyncadd %s208, 0
          %s214 = smul.addr %s15, 8
          %s215 = smul.addr %s214, 8
          %s216 = scalar_lea.hbm %s3, %s215
          %s217 = sshll.u32 %s216, 4
          %s218 = int_to_ptr.hbm [resolvable:$true] %s217
          %s219 = sshll.u32 %s211, 4
          %s220 = int_to_ptr.vmem [resolvable:$true] %s219
          %225 = dma.hbm_to_vmem [thread:$0]  %s218, 1024, %s220, %s208, 128, 128, 8
        $region32: #{tpu_custom_call.1} parent=23 // pred_fallthru
          _
      $region24: #{tpu_custom_call.1} parent=5 // pred_fallthru
        _
      %p226 = scmp.le.s32.totalorder 1, %s15
      %p227 = scmp.lt.s32.totalorder %s15, 3
      %p228 = pnand %p226, %p227
      %p229 = pneg %p228
      // Predicated region
      $region33: #{tpu_custom_call.1} parent=5 // pred_check
        _
      $region34: #{tpu_custom_call.1} parent=5 // pred_check_branch
        %231 = sbr.rel (%p228) target = $region36
      $region35: #{tpu_custom_call.1} parent=5 // pred_region
        %s232 = ssub.s32 %s15, 1
        // Predicated region
        $region37: #{tpu_custom_call.1} parent=35 // pred_check
          %p233 = pneg %p36
        $region38: #{tpu_custom_call.1} parent=35 // pred_check_branch
          %235 = sbr.rel (%p233) target = $region40
        $region39: #{tpu_custom_call.1} parent=35 // pred_region
          %237 = dma.done [#allocation3], 128
        $region40: #{tpu_custom_call.1} parent=35 // pred_fallthru
          _
        // Predicated region
        $region41: #{tpu_custom_call.1} parent=35 // pred_check
          %p238 = pneg %p57
        $region42: #{tpu_custom_call.1} parent=35 // pred_check_branch
          %240 = sbr.rel (%p238) target = $region44
        $region43: #{tpu_custom_call.1} parent=35 // pred_region
          %242 = dma.done [#allocation6], 128
        $region44: #{tpu_custom_call.1} parent=35 // pred_fallthru
          _
        %s243 = sand.u32 %s20, 1
        %s244 = scalar_lea.sflag [#allocation3], %s243
        %s245 = sand.u32 %s70, 1
        %s246 = smul.addr %s245, 64
        %s247 = scalar_lea.vmem [#allocation7], %s246
        // Predicated region
        $region45: #{tpu_custom_call.1} parent=35 // pred_check
          %p248 = pneg %p83
        $region46: #{tpu_custom_call.1} parent=35 // pred_check_branch
          %250 = sbr.rel (%p248) target = $region48
        $region47: #{tpu_custom_call.1} parent=35 // pred_region
          %252 = dma.done %s244, 1024
        $region48: #{tpu_custom_call.1} parent=35 // pred_fallthru
          _
        %s253 = sand.u32 %s20, 1
        %s254 = scalar_lea.sflag [#allocation3], %s253
        %s255 = sand.u32 %s96, 1
        %s256 = smul.addr %s255, 64
        %s257 = scalar_lea.vmem [#allocation8], %s256
        // Predicated region
        $region49: #{tpu_custom_call.1} parent=35 // pred_check
          %p258 = pneg %p109
        $region50: #{tpu_custom_call.1} parent=35 // pred_check_branch
          %260 = sbr.rel (%p258) target = $region52
        $region51: #{tpu_custom_call.1} parent=35 // pred_region
          %262 = dma.done %s254, 1024
        $region52: #{tpu_custom_call.1} parent=35 // pred_fallthru
          _
        %p263 = pneg %p36
        %p264 = pneg %p33
        %p265 = pneg %p57
        %p266 = pneg %p54
        %s267 = sand.u32 %s20, 1
        %s268 = scalar_lea.sflag [#allocation3], %s267
        %s269 = sand.u32 %s70, 1
        %s270 = smul.addr %s269, 64
        %s271 = scalar_lea.vmem [#allocation7], %s270
        %p272 = pneg %p83
        %p273 = pneg %p80
        %s274 = sand.u32 %s20, 1
        %s275 = scalar_lea.sflag [#allocation3], %s274
        %s276 = sand.u32 %s96, 1
        %s277 = smul.addr %s276, 64
        %s278 = scalar_lea.vmem [#allocation8], %s277
        %p279 = pneg %p109
        %p280 = pneg %p106
        %p281 = pneg %p135
        %p282 = pneg %p132
        %s283 = sand.u32 %s122, 1
        %s284 = scalar_lea.sflag [#allocation4], %s283
        %s285 = sand.u32 %s122, 1
        %s286 = scalar_lea.vmem [#allocation9], %s285
        %v288 = vld [vmem:[%s247] sm:$0xff]
        %v289 = vld [vmem:[%s247 + $0x8] sm:$0xff]
        %v290 = vld [vmem:[%s247 + $0x10] sm:$0xff]
        %v291 = vld [vmem:[%s247 + $0x18] sm:$0xff]
        %v292 = vld [vmem:[%s247 + $0x20] sm:$0xff]
        %v293 = vld [vmem:[%s247 + $0x28] sm:$0xff]
        %v294 = vld [vmem:[%s247 + $0x30] sm:$0xff]
        %v295 = vld [vmem:[%s247 + $0x38] sm:$0xff]
        %v296 = vld [vmem:[%s257] sm:$0xff]
        %v297 = vld [vmem:[%s257 + $0x8] sm:$0xff]
        %v298 = vld [vmem:[%s257 + $0x10] sm:$0xff]
        %v299 = vld [vmem:[%s257 + $0x18] sm:$0xff]
        %v300 = vld [vmem:[%s257 + $0x20] sm:$0xff]
        %v301 = vld [vmem:[%s257 + $0x28] sm:$0xff]
        %v302 = vld [vmem:[%s257 + $0x30] sm:$0xff]
        %v303 = vld [vmem:[%s257 + $0x38] sm:$0xff]
        %v304 = vld [vmem:[#allocation2] sm:$0xf]
        %v305 = vld [vmem:[#allocation2 + $0x4] sm:$0xf]
        %v306 = vld [vmem:[#allocation5] sm:$0xf]
        %v307 = vld [vmem:[#allocation5 + $0x4] sm:$0xf]
        %v308 = vpack.c.bf16 %v288, %v288
        %v309 = vpack.c.bf16 %v289, %v289
        %v310 = vpack.c.bf16 %v290, %v290
        %v311 = vpack.c.bf16 %v291, %v291
        %v312 = vpack.c.bf16 %v292, %v292
        %v313 = vpack.c.bf16 %v293, %v293
        %v314 = vpack.c.bf16 %v294, %v294
        %v315 = vpack.c.bf16 %v295, %v295
        %v316 = vpack.c.bf16 %v296, %v296
        %v317 = vpack.c.bf16 %v297, %v297
        %v318 = vpack.c.bf16 %v298, %v298
        %v319 = vpack.c.bf16 %v299, %v299
        %v320 = vpack.c.bf16 %v300, %v300
        %v321 = vpack.c.bf16 %v301, %v301
        %v322 = vpack.c.bf16 %v302, %v302
        %v323 = vpack.c.bf16 %v303, %v303
        %v324 = vmul.f32 %v288, %v288
        %v325 = vmul.f32 %v289, %v289
        %v326 = vmul.f32 %v290, %v290
        %v327 = vmul.f32 %v291, %v291
        %v328 = vmul.f32 %v292, %v292
        %v329 = vmul.f32 %v293, %v293
        %v330 = vmul.f32 %v294, %v294
        %v331 = vmul.f32 %v295, %v295
        %v332 = vpack.c.bf16 %v324, %v324
        %v333 = vpack.c.bf16 %v325, %v325
        %v334 = vpack.c.bf16 %v326, %v326
        %v335 = vpack.c.bf16 %v327, %v327
        %v336 = vpack.c.bf16 %v328, %v328
        %v337 = vpack.c.bf16 %v329, %v329
        %v338 = vpack.c.bf16 %v330, %v330
        %v339 = vpack.c.bf16 %v331, %v331
        %v340 = vmul.f32 %v296, %v296
        %v341 = vmul.f32 %v297, %v297
        %v342 = vmul.f32 %v298, %v298
        %v343 = vmul.f32 %v299, %v299
        %v344 = vmul.f32 %v300, %v300
        %v345 = vmul.f32 %v301, %v301
        %v346 = vmul.f32 %v302, %v302
        %v347 = vmul.f32 %v303, %v303
        %v348 = vpack.c.bf16 %v340, %v340
        %v349 = vpack.c.bf16 %v341, %v341
        %v350 = vpack.c.bf16 %v342, %v342
        %v351 = vpack.c.bf16 %v343, %v343
        %v352 = vpack.c.bf16 %v344, %v344
        %v353 = vpack.c.bf16 %v345, %v345
        %v354 = vpack.c.bf16 %v346, %v346
        %v355 = vpack.c.bf16 %v347, %v347
        %v356 = vmul.f32 %v288, %v296
        %v357 = vmul.f32 %v289, %v297
        %v358 = vmul.f32 %v290, %v298
        %v359 = vmul.f32 %v291, %v299
        %v360 = vmul.f32 %v292, %v300
        %v361 = vmul.f32 %v293, %v301
        %v362 = vmul.f32 %v294, %v302
        %v363 = vmul.f32 %v295, %v303
        %v364 = vpack.c.bf16 %v356, %v356
        %v365 = vpack.c.bf16 %v357, %v357
        %v366 = vpack.c.bf16 %v358, %v358
        %v367 = vpack.c.bf16 %v359, %v359
        %v368 = vpack.c.bf16 %v360, %v360
        %v369 = vpack.c.bf16 %v361, %v361
        %v370 = vpack.c.bf16 %v362, %v362
        %v371 = vpack.c.bf16 %v363, %v363
        %v412 = vunpack.c.l.b16 %v308
        %v413 = vunpack.c.l.b16 %v309
        %v414 = vunpack.c.l.b16 %v310
        %v415 = vunpack.c.l.b16 %v311
        %v416 = vunpack.c.l.b16 %v312
        %v417 = vunpack.c.l.b16 %v313
        %v418 = vunpack.c.l.b16 %v314
        %v419 = vunpack.c.l.b16 %v315
        %v420 = vunpack.c.l.b16 %v316
        %v421 = vunpack.c.l.b16 %v317
        %v422 = vunpack.c.l.b16 %v318
        %v423 = vunpack.c.l.b16 %v319
        %v424 = vunpack.c.l.b16 %v320
        %v425 = vunpack.c.l.b16 %v321
        %v426 = vunpack.c.l.b16 %v322
        %v427 = vunpack.c.l.b16 %v323
        %v428 = vunpack.c.l.b16 %v332
        %v429 = vunpack.c.l.b16 %v333
        %v430 = vunpack.c.l.b16 %v334
        %v431 = vunpack.c.l.b16 %v335
        %v432 = vunpack.c.l.b16 %v336
        %v433 = vunpack.c.l.b16 %v337
        %v434 = vunpack.c.l.b16 %v338
        %v435 = vunpack.c.l.b16 %v339
        %v436 = vunpack.c.l.b16 %v348
        %v437 = vunpack.c.l.b16 %v349
        %v438 = vunpack.c.l.b16 %v350
        %v439 = vunpack.c.l.b16 %v351
        %v440 = vunpack.c.l.b16 %v352
        %v441 = vunpack.c.l.b16 %v353
        %v442 = vunpack.c.l.b16 %v354
        %v443 = vunpack.c.l.b16 %v355
        %v444 = vunpack.c.l.b16 %v364
        %v445 = vunpack.c.l.b16 %v365
        %v446 = vunpack.c.l.b16 %v366
        %v447 = vunpack.c.l.b16 %v367
        %v448 = vunpack.c.l.b16 %v368
        %v449 = vunpack.c.l.b16 %v369
        %v450 = vunpack.c.l.b16 %v370
        %v451 = vunpack.c.l.b16 %v371
        %v452 = vpack.c.b16 %v413, %v412
        %v453 = vpack.c.b16 %v415, %v414
        %v454 = vpack.c.b16 %v417, %v416
        %v455 = vpack.c.b16 %v419, %v418
        %v456 = vpack.c.b16 %v421, %v420
        %v457 = vpack.c.b16 %v423, %v422
        %v458 = vpack.c.b16 %v425, %v424
        %v459 = vpack.c.b16 %v427, %v426
        %v460 = vpack.c.b16 %v429, %v428
        %v461 = vpack.c.b16 %v431, %v430
        %v462 = vpack.c.b16 %v433, %v432
        %v463 = vpack.c.b16 %v435, %v434
        %v464 = vpack.c.b16 %v437, %v436
        %v465 = vpack.c.b16 %v439, %v438
        %v466 = vpack.c.b16 %v441, %v440
        %v467 = vpack.c.b16 %v443, %v442
        %v468 = vpack.c.b16 %v445, %v444
        %v469 = vpack.c.b16 %v447, %v446
        %v470 = vpack.c.b16 %v449, %v448
        %v471 = vpack.c.b16 %v451, %v450
        %v474 = vunpack.c.l.b16 %v306
        %v475 = vunpack.c.l.b16 %v307
        %v476 = vpack.c.b16 %v475, %v474
        %vm478 = vcmask 130048
        %v480 = vsel %vm478, %v452, 0
        %v483 = vsel %vm478, %v453, 0
        %v486 = vsel %vm478, %v454, 0
        %v489 = vsel %vm478, %v455, 0
        %v492 = vsel %vm478, %v456, 0
        %v495 = vsel %vm478, %v457, 0
        %v498 = vsel %vm478, %v458, 0
        %v501 = vsel %vm478, %v459, 0
        %v504 = vsel %vm478, %v460, 0
        %v507 = vsel %vm478, %v461, 0
        %v510 = vsel %vm478, %v462, 0
        %v513 = vsel %vm478, %v463, 0
        %v516 = vsel %vm478, %v464, 0
        %v519 = vsel %vm478, %v465, 0
        %v522 = vsel %vm478, %v466, 0
        %v525 = vsel %vm478, %v467, 0
        %v528 = vsel %vm478, %v468, 0
        %v531 = vsel %vm478, %v469, 0
        %v534 = vsel %vm478, %v470, 0
        %v537 = vsel %vm478, %v471, 0
        %539 = vmatpush.bf16.msra.mxu0 0
        %540 = vmatpush.bf16.msra.mxu0 0
        %541 = vmatpush.bf16.msra.mxu0 0
        %542 = vmatpush.bf16.msra.mxu0 0
        %543 = vmatpush.bf16.msra.mxu0 0
        %544 = vmatpush.bf16.msra.mxu0 0
        %545 = vmatpush.bf16.msra.mxu0 0
        %546 = vmatpush.bf16.msra.mxu0 %v476
        %547 = vmatmul.bf16.gmra.mxu0 %v480
        %v548 = vpop.f32.mrf.mxu0
        %v549 = vadd.f32 0.0, %v548
        %v550 = vpop.f32.mrf.mxu0
        %v551 = vadd.f32 0.0, %v550
        %552 = vmatmul.bf16.gmra.mxu0 %v483
        %v553 = vpop.f32.mrf.mxu0
        %v554 = vadd.f32 0.0, %v553
        %v555 = vpop.f32.mrf.mxu0
        %v556 = vadd.f32 0.0, %v555
        %557 = vmatmul.bf16.gmra.mxu0 %v486
        %v558 = vpop.f32.mrf.mxu0
        %v559 = vadd.f32 0.0, %v558
        %v560 = vpop.f32.mrf.mxu0
        %v561 = vadd.f32 0.0, %v560
        %562 = vmatmul.bf16.gmra.mxu0 %v489
        %v563 = vpop.f32.mrf.mxu0
        %v564 = vadd.f32 0.0, %v563
        %v565 = vpop.f32.mrf.mxu0
        %v566 = vadd.f32 0.0, %v565
        %567 = vmatmul.bf16.gmra.mxu0 %v492
        %v568 = vpop.f32.mrf.mxu0
        %v569 = vadd.f32 0.0, %v568
        %v570 = vpop.f32.mrf.mxu0
        %v571 = vadd.f32 0.0, %v570
        %572 = vmatmul.bf16.gmra.mxu0 %v495
        %v573 = vpop.f32.mrf.mxu0
        %v574 = vadd.f32 0.0, %v573
        %v575 = vpop.f32.mrf.mxu0
        %v576 = vadd.f32 0.0, %v575
        %577 = vmatmul.bf16.gmra.mxu0 %v498
        %v578 = vpop.f32.mrf.mxu0
        %v579 = vadd.f32 0.0, %v578
        %v580 = vpop.f32.mrf.mxu0
        %v581 = vadd.f32 0.0, %v580
        %582 = vmatmul.bf16.gmra.mxu0 %v501
        %v583 = vpop.f32.mrf.mxu0
        %v584 = vadd.f32 0.0, %v583
        %v585 = vpop.f32.mrf.mxu0
        %v586 = vadd.f32 0.0, %v585
        %587 = vmatmul.bf16.gmra.mxu0 %v504
        %v588 = vpop.f32.mrf.mxu0
        %v589 = vadd.f32 0.0, %v588
        %v590 = vpop.f32.mrf.mxu0
        %v591 = vadd.f32 0.0, %v590
        %592 = vmatmul.bf16.gmra.mxu0 %v507
        %v593 = vpop.f32.mrf.mxu0
        %v594 = vadd.f32 0.0, %v593
        %v595 = vpop.f32.mrf.mxu0
        %v596 = vadd.f32 0.0, %v595
        %597 = vmatmul.bf16.gmra.mxu0 %v510
        %v598 = vpop.f32.mrf.mxu0
        %v599 = vadd.f32 0.0, %v598
        %v600 = vpop.f32.mrf.mxu0
        %v601 = vadd.f32 0.0, %v600
        %602 = vmatmul.bf16.gmra.mxu0 %v513
        %v603 = vpop.f32.mrf.mxu0
        %v604 = vadd.f32 0.0, %v603
        %v605 = vpop.f32.mrf.mxu0
        %v606 = vadd.f32 0.0, %v605
        %607 = vmatmul.bf16.gmra.mxu0 %v516
        %v608 = vpop.f32.mrf.mxu0
        %v609 = vadd.f32 0.0, %v608
        %v610 = vpop.f32.mrf.mxu0
        %v611 = vadd.f32 0.0, %v610
        %612 = vmatmul.bf16.gmra.mxu0 %v519
        %v613 = vpop.f32.mrf.mxu0
        %v614 = vadd.f32 0.0, %v613
        %v615 = vpop.f32.mrf.mxu0
        %v616 = vadd.f32 0.0, %v615
        %617 = vmatmul.bf16.gmra.mxu0 %v522
        %v618 = vpop.f32.mrf.mxu0
        %v619 = vadd.f32 0.0, %v618
        %v620 = vpop.f32.mrf.mxu0
        %v621 = vadd.f32 0.0, %v620
        %622 = vmatmul.bf16.gmra.mxu0 %v525
        %v623 = vpop.f32.mrf.mxu0
        %v624 = vadd.f32 0.0, %v623
        %v625 = vpop.f32.mrf.mxu0
        %v626 = vadd.f32 0.0, %v625
        %627 = vmatmul.bf16.gmra.mxu0 %v528
        %v628 = vpop.f32.mrf.mxu0
        %v629 = vadd.f32 0.0, %v628
        %v630 = vpop.f32.mrf.mxu0
        %v631 = vadd.f32 0.0, %v630
        %632 = vmatmul.bf16.gmra.mxu0 %v531
        %v633 = vpop.f32.mrf.mxu0
        %v634 = vadd.f32 0.0, %v633
        %v635 = vpop.f32.mrf.mxu0
        %v636 = vadd.f32 0.0, %v635
        %637 = vmatmul.bf16.gmra.mxu0 %v534
        %v638 = vpop.f32.mrf.mxu0
        %v639 = vadd.f32 0.0, %v638
        %v640 = vpop.f32.mrf.mxu0
        %v641 = vadd.f32 0.0, %v640
        %642 = vmatmul.bf16.gmra.mxu0 %v537
        %v643 = vpop.f32.mrf.mxu0
        %v644 = vadd.f32 0.0, %v643
        %v645 = vpop.f32.mrf.mxu0
        %v646 = vadd.f32 0.0, %v645
        %647 = vdwg.mxu0
        %v648 = vpack.c.bf16 %v549, %v549
        %v649 = vpack.c.bf16 %v551, %v551
        %v650 = vpack.c.bf16 %v554, %v554
        %v651 = vpack.c.bf16 %v556, %v556
        %v652 = vpack.c.bf16 %v559, %v559
        %v653 = vpack.c.bf16 %v561, %v561
        %v654 = vpack.c.bf16 %v564, %v564
        %v655 = vpack.c.bf16 %v566, %v566
        %v656 = vpack.c.bf16 %v569, %v569
        %v657 = vpack.c.bf16 %v571, %v571
        %v658 = vpack.c.bf16 %v574, %v574
        %v659 = vpack.c.bf16 %v576, %v576
        %v660 = vpack.c.bf16 %v579, %v579
        %v661 = vpack.c.bf16 %v581, %v581
        %v662 = vpack.c.bf16 %v584, %v584
        %v663 = vpack.c.bf16 %v586, %v586
        %v664 = vpack.c.bf16 %v589, %v589
        %v665 = vpack.c.bf16 %v591, %v591
        %v666 = vpack.c.bf16 %v594, %v594
        %v667 = vpack.c.bf16 %v596, %v596
        %v668 = vpack.c.bf16 %v599, %v599
        %v669 = vpack.c.bf16 %v601, %v601
        %v670 = vpack.c.bf16 %v604, %v604
        %v671 = vpack.c.bf16 %v606, %v606
        %v672 = vpack.c.bf16 %v609, %v609
        %v673 = vpack.c.bf16 %v611, %v611
        %v674 = vpack.c.bf16 %v614, %v614
        %v675 = vpack.c.bf16 %v616, %v616
        %v676 = vpack.c.bf16 %v619, %v619
        %v677 = vpack.c.bf16 %v621, %v621
        %v678 = vpack.c.bf16 %v624, %v624
        %v679 = vpack.c.bf16 %v626, %v626
        %v680 = vpack.c.bf16 %v629, %v629
        %v681 = vpack.c.bf16 %v631, %v631
        %v682 = vpack.c.bf16 %v634, %v634
        %v683 = vpack.c.bf16 %v636, %v636
        %v684 = vpack.c.bf16 %v639, %v639
        %v685 = vpack.c.bf16 %v641, %v641
        %v686 = vpack.c.bf16 %v644, %v644
        %v687 = vpack.c.bf16 %v646, %v646
        %v690 = vunpack.c.l.b16 %v304
        %v691 = vunpack.c.l.b16 %v305
        %v692 = vpack.c.b16 %v691, %v690
        %v695 = vunpack.c.l.b16 %v648
        %v696 = vunpack.c.l.b16 %v649
        %v697 = vpack.c.b16 %v696, %v695
        %v700 = vsel %vm478, %v692, 0
        %702 = vmatpush.bf16.msra.mxu0 0
        %703 = vmatpush.bf16.msra.mxu0 0
        %704 = vmatpush.bf16.msra.mxu0 0
        %705 = vmatpush.bf16.msra.mxu0 0
        %706 = vmatpush.bf16.msra.mxu0 0
        %707 = vmatpush.bf16.msra.mxu0 0
        %708 = vmatpush.bf16.msra.mxu0 0
        %709 = vmatpush.bf16.msra.mxu0 %v697
        %710 = vmatmul.bf16.gmra.mxu0 %v700
        %v711 = vpop.f32.mrf.mxu0
        %v712 = vadd.f32 0.0, %v711
        %v713 = vpop.f32.mrf.mxu0
        %v714 = vadd.f32 0.0, %v713
        %715 = vdwg.mxu0
        %v718 = vunpack.c.l.b16 %v650
        %v719 = vunpack.c.l.b16 %v651
        %v720 = vpack.c.b16 %v719, %v718
        %722 = vmatpush.bf16.msra.mxu0 0
        %723 = vmatpush.bf16.msra.mxu0 0
        %724 = vmatpush.bf16.msra.mxu0 0
        %725 = vmatpush.bf16.msra.mxu0 0
        %726 = vmatpush.bf16.msra.mxu0 0
        %727 = vmatpush.bf16.msra.mxu0 0
        %728 = vmatpush.bf16.msra.mxu0 0
        %729 = vmatpush.bf16.msra.mxu0 %v720
        %730 = vmatmul.bf16.gmra.mxu0 %v700
        %v731 = vpop.f32.mrf.mxu0
        %v732 = vadd.f32 0.0, %v731
        %v733 = vpop.f32.mrf.mxu0
        %v734 = vadd.f32 0.0, %v733
        %735 = vdwg.mxu0
        %v738 = vunpack.c.l.b16 %v652
        %v739 = vunpack.c.l.b16 %v653
        %v740 = vpack.c.b16 %v739, %v738
        %742 = vmatpush.bf16.msra.mxu0 0
        %743 = vmatpush.bf16.msra.mxu0 0
        %744 = vmatpush.bf16.msra.mxu0 0
        %745 = vmatpush.bf16.msra.mxu0 0
        %746 = vmatpush.bf16.msra.mxu0 0
        %747 = vmatpush.bf16.msra.mxu0 0
        %748 = vmatpush.bf16.msra.mxu0 0
        %749 = vmatpush.bf16.msra.mxu0 %v740
        %750 = vmatmul.bf16.gmra.mxu0 %v700
        %v751 = vpop.f32.mrf.mxu0
        %v752 = vadd.f32 0.0, %v751
        %v753 = vpop.f32.mrf.mxu0
        %v754 = vadd.f32 0.0, %v753
        %755 = vdwg.mxu0
        %v758 = vunpack.c.l.b16 %v654
        %v759 = vunpack.c.l.b16 %v655
        %v760 = vpack.c.b16 %v759, %v758
        %762 = vmatpush.bf16.msra.mxu0 0
        %763 = vmatpush.bf16.msra.mxu0 0
        %764 = vmatpush.bf16.msra.mxu0 0
        %765 = vmatpush.bf16.msra.mxu0 0
        %766 = vmatpush.bf16.msra.mxu0 0
        %767 = vmatpush.bf16.msra.mxu0 0
        %768 = vmatpush.bf16.msra.mxu0 0
        %769 = vmatpush.bf16.msra.mxu0 %v760
        %770 = vmatmul.bf16.gmra.mxu0 %v700
        %v771 = vpop.f32.mrf.mxu0
        %v772 = vadd.f32 0.0, %v771
        %v773 = vpop.f32.mrf.mxu0
        %v774 = vadd.f32 0.0, %v773
        %775 = vdwg.mxu0
        %v778 = vunpack.c.l.b16 %v656
        %v779 = vunpack.c.l.b16 %v657
        %v780 = vpack.c.b16 %v779, %v778
        %782 = vmatpush.bf16.msra.mxu0 0
        %783 = vmatpush.bf16.msra.mxu0 0
        %784 = vmatpush.bf16.msra.mxu0 0
        %785 = vmatpush.bf16.msra.mxu0 0
        %786 = vmatpush.bf16.msra.mxu0 0
        %787 = vmatpush.bf16.msra.mxu0 0
        %788 = vmatpush.bf16.msra.mxu0 0
        %789 = vmatpush.bf16.msra.mxu0 %v780
        %790 = vmatmul.bf16.gmra.mxu0 %v700
        %v791 = vpop.f32.mrf.mxu0
        %v792 = vadd.f32 0.0, %v791
        %v793 = vpop.f32.mrf.mxu0
        %v794 = vadd.f32 0.0, %v793
        %795 = vdwg.mxu0
        %v798 = vunpack.c.l.b16 %v658
        %v799 = vunpack.c.l.b16 %v659
        %v800 = vpack.c.b16 %v799, %v798
        %802 = vmatpush.bf16.msra.mxu0 0
        %803 = vmatpush.bf16.msra.mxu0 0
        %804 = vmatpush.bf16.msra.mxu0 0
        %805 = vmatpush.bf16.msra.mxu0 0
        %806 = vmatpush.bf16.msra.mxu0 0
        %807 = vmatpush.bf16.msra.mxu0 0
        %808 = vmatpush.bf16.msra.mxu0 0
        %809 = vmatpush.bf16.msra.mxu0 %v800
        %810 = vmatmul.bf16.gmra.mxu0 %v700
        %v811 = vpop.f32.mrf.mxu0
        %v812 = vadd.f32 0.0, %v811
        %v813 = vpop.f32.mrf.mxu0
        %v814 = vadd.f32 0.0, %v813
        %815 = vdwg.mxu0
        %v818 = vunpack.c.l.b16 %v660
        %v819 = vunpack.c.l.b16 %v661
        %v820 = vpack.c.b16 %v819, %v818
        %822 = vmatpush.bf16.msra.mxu0 0
        %823 = vmatpush.bf16.msra.mxu0 0
        %824 = vmatpush.bf16.msra.mxu0 0
        %825 = vmatpush.bf16.msra.mxu0 0
        %826 = vmatpush.bf16.msra.mxu0 0
        %827 = vmatpush.bf16.msra.mxu0 0
        %828 = vmatpush.bf16.msra.mxu0 0
        %829 = vmatpush.bf16.msra.mxu0 %v820
        %830 = vmatmul.bf16.gmra.mxu0 %v700
        %v831 = vpop.f32.mrf.mxu0
        %v832 = vadd.f32 0.0, %v831
        %v833 = vpop.f32.mrf.mxu0
        %v834 = vadd.f32 0.0, %v833
        %835 = vdwg.mxu0
        %v838 = vunpack.c.l.b16 %v662
        %v839 = vunpack.c.l.b16 %v663
        %v840 = vpack.c.b16 %v839, %v838
        %842 = vmatpush.bf16.msra.mxu0 0
        %843 = vmatpush.bf16.msra.mxu0 0
        %844 = vmatpush.bf16.msra.mxu0 0
        %845 = vmatpush.bf16.msra.mxu0 0
        %846 = vmatpush.bf16.msra.mxu0 0
        %847 = vmatpush.bf16.msra.mxu0 0
        %848 = vmatpush.bf16.msra.mxu0 0
        %849 = vmatpush.bf16.msra.mxu0 %v840
        %850 = vmatmul.bf16.gmra.mxu0 %v700
        %v851 = vpop.f32.mrf.mxu0
        %v852 = vadd.f32 0.0, %v851
        %v853 = vpop.f32.mrf.mxu0
        %v854 = vadd.f32 0.0, %v853
        %855 = vdwg.mxu0
        %v858 = vunpack.c.l.b16 %v664
        %v859 = vunpack.c.l.b16 %v665
        %v860 = vpack.c.b16 %v859, %v858
        %862 = vmatpush.bf16.msra.mxu0 0
        %863 = vmatpush.bf16.msra.mxu0 0
        %864 = vmatpush.bf16.msra.mxu0 0
        %865 = vmatpush.bf16.msra.mxu0 0
        %866 = vmatpush.bf16.msra.mxu0 0
        %867 = vmatpush.bf16.msra.mxu0 0
        %868 = vmatpush.bf16.msra.mxu0 0
        %869 = vmatpush.bf16.msra.mxu0 %v860
        %870 = vmatmul.bf16.gmra.mxu0 %v700
        %v871 = vpop.f32.mrf.mxu0
        %v872 = vadd.f32 0.0, %v871
        %v873 = vpop.f32.mrf.mxu0
        %v874 = vadd.f32 0.0, %v873
        %875 = vdwg.mxu0
        %v878 = vunpack.c.l.b16 %v666
        %v879 = vunpack.c.l.b16 %v667
        %v880 = vpack.c.b16 %v879, %v878
        %882 = vmatpush.bf16.msra.mxu0 0
        %883 = vmatpush.bf16.msra.mxu0 0
        %884 = vmatpush.bf16.msra.mxu0 0
        %885 = vmatpush.bf16.msra.mxu0 0
        %886 = vmatpush.bf16.msra.mxu0 0
        %887 = vmatpush.bf16.msra.mxu0 0
        %888 = vmatpush.bf16.msra.mxu0 0
        %889 = vmatpush.bf16.msra.mxu0 %v880
        %890 = vmatmul.bf16.gmra.mxu0 %v700
        %v891 = vpop.f32.mrf.mxu0
        %v892 = vadd.f32 0.0, %v891
        %v893 = vpop.f32.mrf.mxu0
        %v894 = vadd.f32 0.0, %v893
        %895 = vdwg.mxu0
        %v898 = vunpack.c.l.b16 %v668
        %v899 = vunpack.c.l.b16 %v669
        %v900 = vpack.c.b16 %v899, %v898
        %902 = vmatpush.bf16.msra.mxu0 0
        %903 = vmatpush.bf16.msra.mxu0 0
        %904 = vmatpush.bf16.msra.mxu0 0
        %905 = vmatpush.bf16.msra.mxu0 0
        %906 = vmatpush.bf16.msra.mxu0 0
        %907 = vmatpush.bf16.msra.mxu0 0
        %908 = vmatpush.bf16.msra.mxu0 0
        %909 = vmatpush.bf16.msra.mxu0 %v900
        %910 = vmatmul.bf16.gmra.mxu0 %v700
        %v911 = vpop.f32.mrf.mxu0
        %v912 = vadd.f32 0.0, %v911
        %v913 = vpop.f32.mrf.mxu0
        %v914 = vadd.f32 0.0, %v913
        %915 = vdwg.mxu0
        %v918 = vunpack.c.l.b16 %v670
        %v919 = vunpack.c.l.b16 %v671
        %v920 = vpack.c.b16 %v919, %v918
        %922 = vmatpush.bf16.msra.mxu0 0
        %923 = vmatpush.bf16.msra.mxu0 0
        %924 = vmatpush.bf16.msra.mxu0 0
        %925 = vmatpush.bf16.msra.mxu0 0
        %926 = vmatpush.bf16.msra.mxu0 0
        %927 = vmatpush.bf16.msra.mxu0 0
        %928 = vmatpush.bf16.msra.mxu0 0
        %929 = vmatpush.bf16.msra.mxu0 %v920
        %930 = vmatmul.bf16.gmra.mxu0 %v700
        %v931 = vpop.f32.mrf.mxu0
        %v932 = vadd.f32 0.0, %v931
        %v933 = vpop.f32.mrf.mxu0
        %v934 = vadd.f32 0.0, %v933
        %935 = vdwg.mxu0
        %v938 = vunpack.c.l.b16 %v672
        %v939 = vunpack.c.l.b16 %v673
        %v940 = vpack.c.b16 %v939, %v938
        %942 = vmatpush.bf16.msra.mxu0 0
        %943 = vmatpush.bf16.msra.mxu0 0
        %944 = vmatpush.bf16.msra.mxu0 0
        %945 = vmatpush.bf16.msra.mxu0 0
        %946 = vmatpush.bf16.msra.mxu0 0
        %947 = vmatpush.bf16.msra.mxu0 0
        %948 = vmatpush.bf16.msra.mxu0 0
        %949 = vmatpush.bf16.msra.mxu0 %v940
        %950 = vmatmul.bf16.gmra.mxu0 %v700
        %v951 = vpop.f32.mrf.mxu0
        %v952 = vadd.f32 0.0, %v951
        %v953 = vpop.f32.mrf.mxu0
        %v954 = vadd.f32 0.0, %v953
        %955 = vdwg.mxu0
        %v958 = vunpack.c.l.b16 %v674
        %v959 = vunpack.c.l.b16 %v675
        %v960 = vpack.c.b16 %v959, %v958
        %962 = vmatpush.bf16.msra.mxu0 0
        %963 = vmatpush.bf16.msra.mxu0 0
        %964 = vmatpush.bf16.msra.mxu0 0
        %965 = vmatpush.bf16.msra.mxu0 0
        %966 = vmatpush.bf16.msra.mxu0 0
        %967 = vmatpush.bf16.msra.mxu0 0
        %968 = vmatpush.bf16.msra.mxu0 0
        %969 = vmatpush.bf16.msra.mxu0 %v960
        %970 = vmatmul.bf16.gmra.mxu0 %v700
        %v971 = vpop.f32.mrf.mxu0
        %v972 = vadd.f32 0.0, %v971
        %v973 = vpop.f32.mrf.mxu0
        %v974 = vadd.f32 0.0, %v973
        %975 = vdwg.mxu0
        %v978 = vunpack.c.l.b16 %v676
        %v979 = vunpack.c.l.b16 %v677
        %v980 = vpack.c.b16 %v979, %v978
        %982 = vmatpush.bf16.msra.mxu0 0
        %983 = vmatpush.bf16.msra.mxu0 0
        %984 = vmatpush.bf16.msra.mxu0 0
        %985 = vmatpush.bf16.msra.mxu0 0
        %986 = vmatpush.bf16.msra.mxu0 0
        %987 = vmatpush.bf16.msra.mxu0 0
        %988 = vmatpush.bf16.msra.mxu0 0
        %989 = vmatpush.bf16.msra.mxu0 %v980
        %990 = vmatmul.bf16.gmra.mxu0 %v700
        %v991 = vpop.f32.mrf.mxu0
        %v992 = vadd.f32 0.0, %v991
        %v993 = vpop.f32.mrf.mxu0
        %v994 = vadd.f32 0.0, %v993
        %995 = vdwg.mxu0
        %v998 = vunpack.c.l.b16 %v678
        %v999 = vunpack.c.l.b16 %v679
        %v1000 = vpack.c.b16 %v999, %v998
        %1002 = vmatpush.bf16.msra.mxu0 0
        %1003 = vmatpush.bf16.msra.mxu0 0
        %1004 = vmatpush.bf16.msra.mxu0 0
        %1005 = vmatpush.bf16.msra.mxu0 0
        %1006 = vmatpush.bf16.msra.mxu0 0
        %1007 = vmatpush.bf16.msra.mxu0 0
        %1008 = vmatpush.bf16.msra.mxu0 0
        %1009 = vmatpush.bf16.msra.mxu0 %v1000
        %1010 = vmatmul.bf16.gmra.mxu0 %v700
        %v1011 = vpop.f32.mrf.mxu0
        %v1012 = vadd.f32 0.0, %v1011
        %v1013 = vpop.f32.mrf.mxu0
        %v1014 = vadd.f32 0.0, %v1013
        %1015 = vdwg.mxu0
        %v1018 = vunpack.c.l.b16 %v680
        %v1019 = vunpack.c.l.b16 %v681
        %v1020 = vpack.c.b16 %v1019, %v1018
        %1022 = vmatpush.bf16.msra.mxu0 0
        %1023 = vmatpush.bf16.msra.mxu0 0
        %1024 = vmatpush.bf16.msra.mxu0 0
        %1025 = vmatpush.bf16.msra.mxu0 0
        %1026 = vmatpush.bf16.msra.mxu0 0
        %1027 = vmatpush.bf16.msra.mxu0 0
        %1028 = vmatpush.bf16.msra.mxu0 0
        %1029 = vmatpush.bf16.msra.mxu0 %v1020
        %1030 = vmatmul.bf16.gmra.mxu0 %v700
        %v1031 = vpop.f32.mrf.mxu0
        %v1032 = vadd.f32 0.0, %v1031
        %v1033 = vpop.f32.mrf.mxu0
        %v1034 = vadd.f32 0.0, %v1033
        %1035 = vdwg.mxu0
        %v1038 = vunpack.c.l.b16 %v682
        %v1039 = vunpack.c.l.b16 %v683
        %v1040 = vpack.c.b16 %v1039, %v1038
        %1042 = vmatpush.bf16.msra.mxu0 0
        %1043 = vmatpush.bf16.msra.mxu0 0
        %1044 = vmatpush.bf16.msra.mxu0 0
        %1045 = vmatpush.bf16.msra.mxu0 0
        %1046 = vmatpush.bf16.msra.mxu0 0
        %1047 = vmatpush.bf16.msra.mxu0 0
        %1048 = vmatpush.bf16.msra.mxu0 0
        %1049 = vmatpush.bf16.msra.mxu0 %v1040
        %1050 = vmatmul.bf16.gmra.mxu0 %v700
        %v1051 = vpop.f32.mrf.mxu0
        %v1052 = vadd.f32 0.0, %v1051
        %v1053 = vpop.f32.mrf.mxu0
        %v1054 = vadd.f32 0.0, %v1053
        %1055 = vdwg.mxu0
        %v1058 = vunpack.c.l.b16 %v684
        %v1059 = vunpack.c.l.b16 %v685
        %v1060 = vpack.c.b16 %v1059, %v1058
        %1062 = vmatpush.bf16.msra.mxu0 0
        %1063 = vmatpush.bf16.msra.mxu0 0
        %1064 = vmatpush.bf16.msra.mxu0 0
        %1065 = vmatpush.bf16.msra.mxu0 0
        %1066 = vmatpush.bf16.msra.mxu0 0
        %1067 = vmatpush.bf16.msra.mxu0 0
        %1068 = vmatpush.bf16.msra.mxu0 0
        %1069 = vmatpush.bf16.msra.mxu0 %v1060
        %1070 = vmatmul.bf16.gmra.mxu0 %v700
        %v1071 = vpop.f32.mrf.mxu0
        %v1072 = vadd.f32 0.0, %v1071
        %v1073 = vpop.f32.mrf.mxu0
        %v1074 = vadd.f32 0.0, %v1073
        %1075 = vdwg.mxu0
        %v1078 = vunpack.c.l.b16 %v686
        %v1079 = vunpack.c.l.b16 %v687
        %v1080 = vpack.c.b16 %v1079, %v1078
        %1082 = vmatpush.bf16.msra.mxu0 0
        %1083 = vmatpush.bf16.msra.mxu0 0
        %1084 = vmatpush.bf16.msra.mxu0 0
        %1085 = vmatpush.bf16.msra.mxu0 0
        %1086 = vmatpush.bf16.msra.mxu0 0
        %1087 = vmatpush.bf16.msra.mxu0 0
        %1088 = vmatpush.bf16.msra.mxu0 0
        %1089 = vmatpush.bf16.msra.mxu0 %v1080
        %1090 = vmatmul.bf16.gmra.mxu0 %v700
        %v1091 = vpop.f32.mrf.mxu0
        %v1092 = vadd.f32 0.0, %v1091
        %v1093 = vpop.f32.mrf.mxu0
        %v1094 = vadd.f32 0.0, %v1093
        %1095 = vdwg.mxu0
        %v1096 = vmul.f32 %v712, %v712
        %v1097 = vmul.f32 %v714, %v714
        %v1098 = vmul.f32 %v732, %v732
        %v1099 = vmul.f32 %v734, %v734
        %v1100 = vmul.f32 %v752, %v752
        %v1101 = vmul.f32 %v754, %v754
        %v1102 = vmul.f32 %v772, %v772
        %v1103 = vmul.f32 %v774, %v774
        %v1104 = vmul.f32 %v792, %v792
        %v1105 = vmul.f32 %v794, %v794
        %v1106 = vmul.f32 %v812, %v812
        %v1107 = vmul.f32 %v814, %v814
        %v1108 = vmul.f32 %v832, %v832
        %v1109 = vmul.f32 %v834, %v834
        %v1110 = vmul.f32 %v852, %v852
        %v1111 = vmul.f32 %v854, %v854
        %v1112 = vmul.f32 %v712, %v792
        %v1113 = vmul.f32 %v714, %v794
        %v1114 = vmul.f32 %v732, %v812
        %v1115 = vmul.f32 %v734, %v814
        %v1116 = vmul.f32 %v752, %v832
        %v1117 = vmul.f32 %v754, %v834
        %v1118 = vmul.f32 %v772, %v852
        %v1119 = vmul.f32 %v774, %v854
        %v1120 = vmul.f32 %v1112, 2.0
        %v1121 = vmul.f32 %v1113, 2.0
        %v1122 = vmul.f32 %v1114, 2.0
        %v1123 = vmul.f32 %v1115, 2.0
        %v1124 = vmul.f32 %v1116, 2.0
        %v1125 = vmul.f32 %v1117, 2.0
        %v1126 = vmul.f32 %v1118, 2.0
        %v1127 = vmul.f32 %v1119, 2.0
        %v1128 = vadd.f32 %v1120, 0.0001
        %v1129 = vadd.f32 %v1121, 0.0001
        %v1130 = vadd.f32 %v1122, 0.0001
        %v1131 = vadd.f32 %v1123, 0.0001
        %v1132 = vadd.f32 %v1124, 0.0001
        %v1133 = vadd.f32 %v1125, 0.0001
        %v1134 = vadd.f32 %v1126, 0.0001
        %v1135 = vadd.f32 %v1127, 0.0001
        %v1136 = vsub.f32 %v1032, %v1112
        %v1137 = vsub.f32 %v1034, %v1113
        %v1138 = vsub.f32 %v1052, %v1114
        %v1139 = vsub.f32 %v1054, %v1115
        %v1140 = vsub.f32 %v1072, %v1116
        %v1141 = vsub.f32 %v1074, %v1117
        %v1142 = vsub.f32 %v1092, %v1118
        %v1143 = vsub.f32 %v1094, %v1119
        %v1144 = vmul.f32 %v1136, 2.0
        %v1145 = vmul.f32 %v1137, 2.0
        %v1146 = vmul.f32 %v1138, 2.0
        %v1147 = vmul.f32 %v1139, 2.0
        %v1148 = vmul.f32 %v1140, 2.0
        %v1149 = vmul.f32 %v1141, 2.0
        %v1150 = vmul.f32 %v1142, 2.0
        %v1151 = vmul.f32 %v1143, 2.0
        %v1152 = vadd.f32 %v1144, 0.0009
        %v1153 = vadd.f32 %v1145, 0.0009
        %v1154 = vadd.f32 %v1146, 0.0009
        %v1155 = vadd.f32 %v1147, 0.0009
        %v1156 = vadd.f32 %v1148, 0.0009
        %v1157 = vadd.f32 %v1149, 0.0009
        %v1158 = vadd.f32 %v1150, 0.0009
        %v1159 = vadd.f32 %v1151, 0.0009
        %v1160 = vmul.f32 %v1128, %v1152
        %v1161 = vmul.f32 %v1129, %v1153
        %v1162 = vmul.f32 %v1130, %v1154
        %v1163 = vmul.f32 %v1131, %v1155
        %v1164 = vmul.f32 %v1132, %v1156
        %v1165 = vmul.f32 %v1133, %v1157
        %v1166 = vmul.f32 %v1134, %v1158
        %v1167 = vmul.f32 %v1135, %v1159
        %v1168 = vadd.f32 %v1096, %v1104
        %v1169 = vadd.f32 %v1097, %v1105
        %v1170 = vadd.f32 %v1098, %v1106
        %v1171 = vadd.f32 %v1099, %v1107
        %v1172 = vadd.f32 %v1100, %v1108
        %v1173 = vadd.f32 %v1101, %v1109
        %v1174 = vadd.f32 %v1102, %v1110
        %v1175 = vadd.f32 %v1103, %v1111
        %v1176 = vadd.f32 %v1168, 0.0001
        %v1177 = vadd.f32 %v1169, 0.0001
        %v1178 = vadd.f32 %v1170, 0.0001
        %v1179 = vadd.f32 %v1171, 0.0001
        %v1180 = vadd.f32 %v1172, 0.0001
        %v1181 = vadd.f32 %v1173, 0.0001
        %v1182 = vadd.f32 %v1174, 0.0001
        %v1183 = vadd.f32 %v1175, 0.0001
        %v1184 = vsub.f32 %v872, %v1096
        %v1185 = vsub.f32 %v874, %v1097
        %v1186 = vsub.f32 %v892, %v1098
        %v1187 = vsub.f32 %v894, %v1099
        %v1188 = vsub.f32 %v912, %v1100
        %v1189 = vsub.f32 %v914, %v1101
        %v1190 = vsub.f32 %v932, %v1102
        %v1191 = vsub.f32 %v934, %v1103
        %v1192 = vsub.f32 %v952, %v1104
        %v1193 = vsub.f32 %v954, %v1105
        %v1194 = vsub.f32 %v972, %v1106
        %v1195 = vsub.f32 %v974, %v1107
        %v1196 = vsub.f32 %v992, %v1108
        %v1197 = vsub.f32 %v994, %v1109
        %v1198 = vsub.f32 %v1012, %v1110
        %v1199 = vsub.f32 %v1014, %v1111
        %v1200 = vadd.f32 %v1184, %v1192
        %v1201 = vadd.f32 %v1185, %v1193
        %v1202 = vadd.f32 %v1186, %v1194
        %v1203 = vadd.f32 %v1187, %v1195
        %v1204 = vadd.f32 %v1188, %v1196
        %v1205 = vadd.f32 %v1189, %v1197
        %v1206 = vadd.f32 %v1190, %v1198
        %v1207 = vadd.f32 %v1191, %v1199
        %v1208 = vadd.f32 %v1200, 0.0009
        %v1209 = vadd.f32 %v1201, 0.0009
        %v1210 = vadd.f32 %v1202, 0.0009
        %v1211 = vadd.f32 %v1203, 0.0009
        %v1212 = vadd.f32 %v1204, 0.0009
        %v1213 = vadd.f32 %v1205, 0.0009
        %v1214 = vadd.f32 %v1206, 0.0009
        %v1215 = vadd.f32 %v1207, 0.0009
        %v1216 = vmul.f32 %v1176, %v1208
        %v1217 = vmul.f32 %v1177, %v1209
        %v1218 = vmul.f32 %v1178, %v1210
        %v1219 = vmul.f32 %v1179, %v1211
        %v1220 = vmul.f32 %v1180, %v1212
        %v1221 = vmul.f32 %v1181, %v1213
        %v1222 = vmul.f32 %v1182, %v1214
        %v1223 = vmul.f32 %v1183, %v1215
        %v1224 = vrcp.pop %v1216
        %v1225 = vrcp.pop %v1217
        %v1226 = vrcp.pop %v1218
        %v1227 = vrcp.pop %v1219
        %v1228 = vrcp.pop %v1220
        %v1229 = vrcp.pop %v1221
        %v1230 = vrcp.pop %v1222
        %v1231 = vrcp.pop %v1223
        %v1232 = vmul.f32 %v1160, %v1224
        %v1233 = vmul.f32 %v1161, %v1225
        %v1234 = vmul.f32 %v1162, %v1226
        %v1235 = vmul.f32 %v1163, %v1227
        %v1236 = vmul.f32 %v1164, %v1228
        %v1237 = vmul.f32 %v1165, %v1229
        %v1238 = vmul.f32 %v1166, %v1230
        %v1239 = vmul.f32 %v1167, %v1231
        %v1240 = vsel %vm478, %v1232, 0.0
        %v1241 = vsel %vm478, %v1234, 0.0
        %v1242 = vadd.f32 %v1240, %v1241
        %v1243 = vsel %vm478, %v1236, 0.0
        %v1244 = vadd.f32 %v1242, %v1243
        %v1245 = vsel %vm478, %v1238, 0.0
        %v1246 = vadd.f32 %v1244, %v1245
        %v1247 = vsel %vm478, %v1233, 0.0
        %v1248 = vsel %vm478, %v1235, 0.0
        %v1249 = vadd.f32 %v1247, %v1248
        %v1250 = vsel %vm478, %v1237, 0.0
        %v1251 = vadd.f32 %v1249, %v1250
        %v1252 = vsel %vm478, %v1239, 0.0
        %v1253 = vadd.f32 %v1251, %v1252
        %v1254 = vsel %vm478, %v1246, 0.0
        %v1255 = vsel %vm478, %v1253, 0.0
        %v1256 = vadd.f32 %v1254, %v1255
        %v1257 = vrot.slane %v1256, 4
        %v1258 = vadd.f32 %v1256, %v1257
        %v1259 = vrot.slane %v1258, 2
        %v1260 = vadd.f32 %v1258, %v1259
        %v1261 = vrot.slane %v1260, 1
        %v1262 = vadd.f32 %v1260, %v1261
        %vm1263 = vcmask 122880
        %1264 = vst.msk [vmem:[%s286] sm:$0x1] %vm1263, %v1262
        %s1265 = sand.u32 %s122, 1
        %s1266 = scalar_lea.sflag [#allocation4], %s1265
        %s1267 = sand.u32 %s122, 1
        %s1268 = scalar_lea.vmem [#allocation9], %s1267
        // Predicated region
        $region53: #{tpu_custom_call.1} parent=35 // pred_check
          %p1269 = pneg %p132
        $region54: #{tpu_custom_call.1} parent=35 // pred_check_branch
          %1271 = sbr.rel (%p1269) target = $region56
        $region55: #{tpu_custom_call.1} parent=35 // pred_region
          %1273 = vsyncadd %s1266, 0
          %s1274 = scalar_lea.hbm %s4, %s20
          %s1276 = sshll.u32 %s1268, 4
          %s1277 = int_to_ptr.vmem [resolvable:$true] %s1276
          %s1278 = sshll.u32 %s1274, 4
          %s1279 = int_to_ptr.hbm [resolvable:$true] %s1278
          %1281 = dma.vmem_to_hbm [thread:$0]  %s1277, 16, %s1279, %s1266
        $region56: #{tpu_custom_call.1} parent=35 // pred_fallthru
          _
      $region36: #{tpu_custom_call.1} parent=5 // pred_fallthru
        _
      %p1282 = scmp.le.s32.totalorder 2, %s15
      // Predicated region
      $region57: #{tpu_custom_call.1} parent=5 // pred_check
        %p1283 = pneg %p1282
      $region58: #{tpu_custom_call.1} parent=5 // pred_check_branch
        %1285 = sbr.rel (%p1283) target = $region60
      $region59: #{tpu_custom_call.1} parent=5 // pred_region
        %s1286 = ssub.s32 %s15, 2
        // Predicated region
        $region61: #{tpu_custom_call.1} parent=59 // pred_check
          %p1287 = pneg %p138
        $region62: #{tpu_custom_call.1} parent=59 // pred_check_branch
          %1289 = sbr.rel (%p1287) target = $region64
        $region63: #{tpu_custom_call.1} parent=59 // pred_region
          %s1290 = sand.u32 %s123, 1
          %s1291 = scalar_lea.sflag [#allocation4], %s1290
          %s1292 = sand.u32 %s123, 1
          %s1293 = scalar_lea.vmem [#allocation9], %s1292
          %1295 = dma.done %s1291, 16
        $region64: #{tpu_custom_call.1} parent=59 // pred_fallthru
          _
      $region60: #{tpu_custom_call.1} parent=5 // pred_fallthru
        _
    $region6: #{tpu_custom_call.1} parent=1 // loop_footer
      %s19 = sadd.s32 1, %s15
    $region7: #{tpu_custom_call.1} parent=1 // loop_footer_branch
      %14 = sbr.rel target = $region3
    $region8: #{tpu_custom_call.1} parent=1 // loop_exit
      _
    %1296 = vsyncpa [#allocation3], 1
    %s1297 = scalar_lea.sflag [#allocation3], 1
    %1298 = vsyncpa %s1297, 1
    %1299 = vsyncpa [#allocation6], 1
    %1300 = vsyncpa [#allocation4], 1
    %s1301 = scalar_lea.sflag [#allocation4], 1
    %1302 = vsyncpa %s1301, 1

// kernel: tpu_custom_call.1
$region0: #{tpu_custom_call.1}
  #allocation0 [shape = 'u32[]', space=smem, size = 0x4, offset = 0x4, fixed_abs, tag = 'smem constant byte address 0x4 - core index']
  #allocation1 [shape = 'u32[72,128]{1,0:T(1,128)}', space=vmem, size = 0x9000, scoped, tag = 'internal scratch']
  %s0 = inlined_call_operand.hbm [shape: bf16[16,16], index: 0, kind: input, shape index: {}]
  %s1 = inlined_call_operand.hbm [shape: bf16[16,16], index: 1, kind: input, shape index: {}]
  %s2 = inlined_call_operand.hbm [shape: f32[2,4,16,16], index: 2, kind: input, shape index: {}]
  %s3 = inlined_call_operand.hbm [shape: f32[2,4,16,16], index: 3, kind: input, shape index: {}]
  %s4 = inlined_call_operand.hbm [shape: f32[2,1,16], index: 4, kind: output, shape index: {}]
  %s5 = sld [smem:[#allocation0]]
  $region65: #{tpu_custom_call.1} parent=0
    _
  %s7 = ssub.s32 1, %s5
  %s8 = scalar_select 0, %s7, %s5
  $region1: #{tpu_custom_call.1} parent=0
    #allocation2 [shape = 'u8[4096]{0}', space=vmem, size = 0x1000, scoped, tag = 'input window, operand 0, single buffered']
    #allocation3 [shape = 's32[2]{0}', space=sflag, size = 0x8, scoped, tag = 'scoped memory for tpu_custom_call.1']
    #allocation4 [shape = 's32[2]{0}', space=sflag, size = 0x8, scoped, tag = 'scoped memory for tpu_custom_call.1']
    #allocation5 [shape = 'u8[4096]{0}', space=vmem, size = 0x1000, scoped, tag = 'input window, operand 1, single buffered']
    #allocation6 [shape = 's32[1]{0}', space=sflag, size = 0x4, scoped, tag = 'scoped memory for tpu_custom_call.1']
    #allocation7 [shape = 'u8[65536]{0}', space=vmem, size = 0x10000, scoped, tag = 'input window, operand 2']
    #allocation8 [shape = 'u8[65536]{0}', space=vmem, size = 0x10000, scoped, tag = 'input window, operand 3']
    #allocation9 [shape = 'u8[1024]{0}', space=vmem, size = 0x400, scoped, tag = 'output window, operand 0']
    %9 = vsyncpa [#allocation3], 0
    %10 = vsyncpa [#allocation6], 0
    %11 = vsyncpa [#allocation4], 0
    %s12 = scalar_lea.sflag [#allocation4], 1
    %13 = vsyncpa %s12, 0
    loop: start=0, step=1, limit=4
    $region2: #{tpu_custom_call.1} parent=1 // loop_pre_header
      _
    $region3: #{tpu_custom_call.1} parent=1 // loop_header
      %s15 = sphi 0, %s19
      %p16 = scmp.ge.s32.totalorder %s15, 4
      %s23 = sphi 0, %s23
      %s25 = sphi 0, %s23
      %s26 = sphi 0, %s25
      %s40 = sphi 0, %s26
      %s44 = sphi 0, %s44
      %s46 = sphi 0, %s44
      %s47 = sphi 0, %s46
      %s61 = sphi 0, %s47
      %s67 = sphi 0, %s69
      %s70 = sphi 0, %s67
      %s71 = sphi 0, %s70
      %s87 = sphi 0, %s71
      %s93 = sphi 0, %s95
      %s96 = sphi 0, %s93
      %s97 = sphi 0, %s96
      %s113 = sphi 0, %s97
      %s119 = sphi 0, %s121
      %s122 = sphi 0, %s119
      %s123 = sphi 0, %s122
      %s139 = sphi 0, %s123
    $region4: #{tpu_custom_call.1} parent=1 // loop_header_branch
      %18 = sbr.rel (%p16) target = $region8
    $region5: #{tpu_custom_call.1} parent=1 // loop_body
      %s20 = ssub.s32 %s15, 1
      %s21 = ssub.s32 %s15, 2
      %s22 = sadd.s32 %s15, 1
      %s24 = sadd.s32 %s23, 1
      %p27 = scmp.eq.s32.totalorder %s15, 1
      %p28 = scmp.ne.s32.totalorder %s23, %s25
      %p29 = scmp.eq.s32.totalorder %s15, 0
      %p30 = por %p28, %p29
      %p31 = scmp.ne.s32.totalorder %s23, %s25
      %p32 = scmp.eq.s32.totalorder %s20, 1
      %p33 = por %p31, %p32
      %p34 = scmp.ne.s32.totalorder %s25, %s26
      %p35 = scmp.eq.s32.totalorder %s20, 0
      %p36 = por %p34, %p35
      %p37 = scmp.ne.s32.totalorder %s25, %s26
      %p38 = scmp.eq.s32.totalorder %s21, 1
      %p39 = por %p37, %p38
      %p41 = scmp.ne.s32.totalorder %s26, %s40
      %p42 = scmp.eq.s32.totalorder %s21, 0
      %p43 = por %p41, %p42
      %s45 = sadd.s32 %s44, 1
      %p48 = scmp.eq.s32.totalorder %s15, 1
      %p49 = scmp.ne.s32.totalorder %s44, %s46
      %p50 = scmp.eq.s32.totalorder %s15, 0
      %p51 = por %p49, %p50
      %p52 = scmp.ne.s32.totalorder %s44, %s46
      %p53 = scmp.eq.s32.totalorder %s20, 1
      %p54 = por %p52, %p53
      %p55 = scmp.ne.s32.totalorder %s46, %s47
      %p56 = scmp.eq.s32.totalorder %s20, 0
      %p57 = por %p55, %p56
      %p58 = scmp.ne.s32.totalorder %s46, %s47
      %p59 = scmp.eq.s32.totalorder %s21, 1
      %p60 = por %p58, %p59
      %p62 = scmp.ne.s32.totalorder %s47, %s61
      %p63 = scmp.eq.s32.totalorder %s21, 0
      %p64 = por %p62, %p63
      %s65 = ssub.s32 %s15, %s22
      %p66 = scmp.eq.s32.totalorder %s65, 0
      %s68 = sadd.s32 %s67, 1
      %s69 = scalar_select %p66, %s67, %s68
      %p72 = pneg %p66
      %p73 = scmp.eq.s32.totalorder %s15, 1
      %p74 = por %p72, %p73
      %p75 = scmp.ne.s32.totalorder %s67, %s70
      %p76 = scmp.eq.s32.totalorder %s15, 0
      %p77 = por %p75, %p76
      %p78 = scmp.ne.s32.totalorder %s67, %s70
      %p79 = scmp.eq.s32.totalorder %s20, 1
      %p80 = por %p78, %p79
      %p81 = scmp.ne.s32.totalorder %s70, %s71
      %p82 = scmp.eq.s32.totalorder %s20, 0
      %p83 = por %p81, %p82
      %p84 = scmp.ne.s32.totalorder %s70, %s71
      %p85 = scmp.eq.s32.totalorder %s21, 1
      %p86 = por %p84, %p85
      %p88 = scmp.ne.s32.totalorder %s71, %s87
      %p89 = scmp.eq.s32.totalorder %s21, 0
      %p90 = por %p88, %p89
      %s91 = ssub.s32 %s15, %s22
      %p92 = scmp.eq.s32.totalorder %s91, 0
      %s94 = sadd.s32 %s93, 1
      %s95 = scalar_select %p92, %s93, %s94
      %p98 = pneg %p92
      %p99 = scmp.eq.s32.totalorder %s15, 1
      %p100 = por %p98, %p99
      %p101 = scmp.ne.s32.totalorder %s93, %s96
      %p102 = scmp.eq.s32.totalorder %s15, 0
      %p103 = por %p101, %p102
      %p104 = scmp.ne.s32.totalorder %s93, %s96
      %p105 = scmp.eq.s32.totalorder %s20, 1
      %p106 = por %p104, %p105
      %p107 = scmp.ne.s32.totalorder %s96, %s97
      %p108 = scmp.eq.s32.totalorder %s20, 0
      %p109 = por %p107, %p108
      %p110 = scmp.ne.s32.totalorder %s96, %s97
      %p111 = scmp.eq.s32.totalorder %s21, 1
      %p112 = por %p110, %p111
      %p114 = scmp.ne.s32.totalorder %s97, %s113
      %p115 = scmp.eq.s32.totalorder %s21, 0
      %p116 = por %p114, %p115
      %s117 = ssub.s32 %s15, %s22
      %p118 = scmp.eq.s32.totalorder %s117, 0
      %s120 = sadd.s32 %s119, 1
      %s121 = scalar_select %p118, %s119, %s120
      %p124 = pneg %p118
      %p125 = scmp.eq.s32.totalorder %s15, 1
      %p126 = por %p124, %p125
      %p127 = scmp.ne.s32.totalorder %s119, %s122
      %p128 = scmp.eq.s32.totalorder %s15, 0
      %p129 = por %p127, %p128
      %p130 = scmp.ne.s32.totalorder %s119, %s122
      %p131 = scmp.eq.s32.totalorder %s20, 1
      %p132 = por %p130, %p131
      %p133 = scmp.ne.s32.totalorder %s122, %s123
      %p134 = scmp.eq.s32.totalorder %s20, 0
      %p135 = por %p133, %p134
      %p136 = scmp.ne.s32.totalorder %s122, %s123
      %p137 = scmp.eq.s32.totalorder %s21, 1
      %p138 = por %p136, %p137
      %p140 = scmp.ne.s32.totalorder %s123, %s139
      %p141 = scmp.eq.s32.totalorder %s21, 0
      %p142 = por %p140, %p141
      %p143 = scmp.le.s32.totalorder 1, %s15
      %p144 = scmp.lt.s32.totalorder %s15, 3
      %p145 = pnand %p143, %p144
      %p146 = pneg %p145
      // Predicated region
      $region9: #{tpu_custom_call.1} parent=5 // pred_check
        _
      $region10: #{tpu_custom_call.1} parent=5 // pred_check_branch
        %148 = sbr.rel (%p145) target = $region12
      $region11: #{tpu_custom_call.1} parent=5 // pred_region
        %s149 = ssub.s32 %s15, 1
        // Predicated region
        $region13: #{tpu_custom_call.1} parent=11 // pred_check
          %p150 = pneg %p36
        $region14: #{tpu_custom_call.1} parent=11 // pred_check_branch
          %152 = sbr.rel (%p150) target = $region16
        $region15: #{tpu_custom_call.1} parent=11 // pred_region
          %154 = vsyncadd [#allocation3], 0
          %s155 = sshll.u32 %s0, 4
          %s156 = int_to_ptr.hbm [resolvable:$true] %s155
          %s157 = sshll.u32 [#allocation2], 4
          %s158 = int_to_ptr.vmem [resolvable:$true] %s157
          %163 = dma.hbm_to_vmem [thread:$0]  %s156, 128, %s158, [#allocation3], 64, 64, 4
        $region16: #{tpu_custom_call.1} parent=11 // pred_fallthru
          _
        // Predicated region
        $region17: #{tpu_custom_call.1} parent=11 // pred_check
          %p164 = pneg %p57
        $region18: #{tpu_custom_call.1} parent=11 // pred_check_branch
          %166 = sbr.rel (%p164) target = $region20
        $region19: #{tpu_custom_call.1} parent=11 // pred_region
          %168 = vsyncadd [#allocation6], 0
          %s169 = sshll.u32 %s1, 4
          %s170 = int_to_ptr.hbm [resolvable:$true] %s169
          %s171 = sshll.u32 [#allocation5], 4
          %s172 = int_to_ptr.vmem [resolvable:$true] %s171
          %177 = dma.hbm_to_vmem [thread:$0]  %s170, 128, %s172, [#allocation6], 64, 64, 4
        $region20: #{tpu_custom_call.1} parent=11 // pred_fallthru
          _
      $region12: #{tpu_custom_call.1} parent=5 // pred_fallthru
        _
      %p178 = scmp.lt.s32.totalorder %s15, 2
      // Predicated region
      $region21: #{tpu_custom_call.1} parent=5 // pred_check
        %p179 = pneg %p178
      $region22: #{tpu_custom_call.1} parent=5 // pred_check_branch
        %181 = sbr.rel (%p179) target = $region24
      $region23: #{tpu_custom_call.1} parent=5 // pred_region
        // Predicated region
        $region25: #{tpu_custom_call.1} parent=23 // pred_check
          %p182 = pneg %p77
        $region26: #{tpu_custom_call.1} parent=23 // pred_check_branch
          %184 = sbr.rel (%p182) target = $region28
        $region27: #{tpu_custom_call.1} parent=23 // pred_region
          %s185 = sand.u32 %s15, 1
          %s186 = scalar_lea.sflag [#allocation3], %s185
          %s187 = sand.u32 %s67, 1
          %s188 = smul.addr %s187, 64
          %s189 = scalar_lea.vmem [#allocation7], %s188
          %191 = vsyncadd %s186, 0
          %s192 = smul.addr %s15, 8
          %s193 = smul.addr %s192, 8
          %s194 = scalar_lea.hbm %s2, %s193
          %s195 = sshll.u32 %s194, 4
          %s196 = int_to_ptr.hbm [resolvable:$true] %s195
          %s197 = sshll.u32 %s189, 4
          %s198 = int_to_ptr.vmem [resolvable:$true] %s197
          %203 = dma.hbm_to_vmem [thread:$0]  %s196, 1024, %s198, %s186, 128, 128, 8
        $region28: #{tpu_custom_call.1} parent=23 // pred_fallthru
          _
        // Predicated region
        $region29: #{tpu_custom_call.1} parent=23 // pred_check
          %p204 = pneg %p103
        $region30: #{tpu_custom_call.1} parent=23 // pred_check_branch
          %206 = sbr.rel (%p204) target = $region32
        $region31: #{tpu_custom_call.1} parent=23 // pred_region
          %s207 = sand.u32 %s15, 1
          %s208 = scalar_lea.sflag [#allocation3], %s207
          %s209 = sand.u32 %s93, 1
          %s210 = smul.addr %s209, 64
          %s211 = scalar_lea.vmem [#allocation8], %s210
          %213 = vsyncadd %s208, 0
          %s214 = smul.addr %s15, 8
          %s215 = smul.addr %s214, 8
          %s216 = scalar_lea.hbm %s3, %s215
          %s217 = sshll.u32 %s216, 4
          %s218 = int_to_ptr.hbm [resolvable:$true] %s217
          %s219 = sshll.u32 %s211, 4
          %s220 = int_to_ptr.vmem [resolvable:$true] %s219
          %225 = dma.hbm_to_vmem [thread:$0]  %s218, 1024, %s220, %s208, 128, 128, 8
        $region32: #{tpu_custom_call.1} parent=23 // pred_fallthru
          _
      $region24: #{tpu_custom_call.1} parent=5 // pred_fallthru
        _
      %p226 = scmp.le.s32.totalorder 1, %s15
      %p227 = scmp.lt.s32.totalorder %s15, 3
      %p228 = pnand %p226, %p227
      %p229 = pneg %p228
      // Predicated region
      $region33: #{tpu_custom_call.1} parent=5 // pred_check
        _
      $region34: #{tpu_custom_call.1} parent=5 // pred_check_branch
        %231 = sbr.rel (%p228) target = $region36
      $region35: #{tpu_custom_call.1} parent=5 // pred_region
        %s232 = ssub.s32 %s15, 1
        // Predicated region
        $region37: #{tpu_custom_call.1} parent=35 // pred_check
          %p233 = pneg %p36
        $region38: #{tpu_custom_call.1} parent=35 // pred_check_branch
          %235 = sbr.rel (%p233) target = $region40
        $region39: #{tpu_custom_call.1} parent=35 // pred_region
          %237 = dma.done [#allocation3], 128
        $region40: #{tpu_custom_call.1} parent=35 // pred_fallthru
          _
        // Predicated region
        $region41: #{tpu_custom_call.1} parent=35 // pred_check
          %p238 = pneg %p57
        $region42: #{tpu_custom_call.1} parent=35 // pred_check_branch
          %240 = sbr.rel (%p238) target = $region44
        $region43: #{tpu_custom_call.1} parent=35 // pred_region
          %242 = dma.done [#allocation6], 128
        $region44: #{tpu_custom_call.1} parent=35 // pred_fallthru
          _
        %s243 = sand.u32 %s20, 1
        %s244 = scalar_lea.sflag [#allocation3], %s243
        %s245 = sand.u32 %s70, 1
        %s246 = smul.addr %s245, 64
        %s247 = scalar_lea.vmem [#allocation7], %s246
        // Predicated region
        $region45: #{tpu_custom_call.1} parent=35 // pred_check
          %p248 = pneg %p83
        $region46: #{tpu_custom_call.1} parent=35 // pred_check_branch
          %250 = sbr.rel (%p248) target = $region48
        $region47: #{tpu_custom_call.1} parent=35 // pred_region
          %252 = dma.done %s244, 1024
        $region48: #{tpu_custom_call.1} parent=35 // pred_fallthru
          _
        %s253 = sand.u32 %s20, 1
        %s254 = scalar_lea.sflag [#allocation3], %s253
        %s255 = sand.u32 %s96, 1
        %s256 = smul.addr %s255, 64
        %s257 = scalar_lea.vmem [#allocation8], %s256
        // Predicated region
        $region49: #{tpu_custom_call.1} parent=35 // pred_check
          %p258 = pneg %p109
        $region50: #{tpu_custom_call.1} parent=35 // pred_check_branch
          %260 = sbr.rel (%p258) target = $region52
        $region51: #{tpu_custom_call.1} parent=35 // pred_region
          %262 = dma.done %s254, 1024
        $region52: #{tpu_custom_call.1} parent=35 // pred_fallthru
          _
        %p263 = pneg %p36
        %p264 = pneg %p33
        %p265 = pneg %p57
        %p266 = pneg %p54
        %s267 = sand.u32 %s20, 1
        %s268 = scalar_lea.sflag [#allocation3], %s267
        %s269 = sand.u32 %s70, 1
        %s270 = smul.addr %s269, 64
        %s271 = scalar_lea.vmem [#allocation7], %s270
        %p272 = pneg %p83
        %p273 = pneg %p80
        %s274 = sand.u32 %s20, 1
        %s275 = scalar_lea.sflag [#allocation3], %s274
        %s276 = sand.u32 %s96, 1
        %s277 = smul.addr %s276, 64
        %s278 = scalar_lea.vmem [#allocation8], %s277
        %p279 = pneg %p109
        %p280 = pneg %p106
        %p281 = pneg %p135
        %p282 = pneg %p132
        %s283 = sand.u32 %s122, 1
        %s284 = scalar_lea.sflag [#allocation4], %s283
        %s285 = sand.u32 %s122, 1
        %s286 = scalar_lea.vmem [#allocation9], %s285
        %v288 = vld [vmem:[%s247] sm:$0xff]
        %v289 = vld [vmem:[%s247 + $0x8] sm:$0xff]
        %v290 = vld [vmem:[%s247 + $0x10] sm:$0xff]
        %v291 = vld [vmem:[%s247 + $0x18] sm:$0xff]
        %v292 = vld [vmem:[%s247 + $0x20] sm:$0xff]
        %v293 = vld [vmem:[%s247 + $0x28] sm:$0xff]
        %v294 = vld [vmem:[%s247 + $0x30] sm:$0xff]
        %v295 = vld [vmem:[%s247 + $0x38] sm:$0xff]
        %v296 = vld [vmem:[%s257] sm:$0xff]
        %v297 = vld [vmem:[%s257 + $0x8] sm:$0xff]
        %v298 = vld [vmem:[%s257 + $0x10] sm:$0xff]
        %v299 = vld [vmem:[%s257 + $0x18] sm:$0xff]
        %v300 = vld [vmem:[%s257 + $0x20] sm:$0xff]
        %v301 = vld [vmem:[%s257 + $0x28] sm:$0xff]
        %v302 = vld [vmem:[%s257 + $0x30] sm:$0xff]
        %v303 = vld [vmem:[%s257 + $0x38] sm:$0xff]
        %v304 = vld [vmem:[#allocation2] sm:$0xf]
        %v305 = vld [vmem:[#allocation2 + $0x4] sm:$0xf]
        %v306 = vld [vmem:[#allocation5] sm:$0xf]
        %v307 = vld [vmem:[#allocation5 + $0x4] sm:$0xf]
        %v308 = vpack.c.bf16 %v288, %v288
        %v309 = vpack.c.bf16 %v289, %v289
        %v310 = vpack.c.bf16 %v290, %v290
        %v311 = vpack.c.bf16 %v291, %v291
        %v312 = vpack.c.bf16 %v292, %v292
        %v313 = vpack.c.bf16 %v293, %v293
        %v314 = vpack.c.bf16 %v294, %v294
        %v315 = vpack.c.bf16 %v295, %v295
        %v316 = vpack.c.bf16 %v296, %v296
        %v317 = vpack.c.bf16 %v297, %v297
        %v318 = vpack.c.bf16 %v298, %v298
        %v319 = vpack.c.bf16 %v299, %v299
        %v320 = vpack.c.bf16 %v300, %v300
        %v321 = vpack.c.bf16 %v301, %v301
        %v322 = vpack.c.bf16 %v302, %v302
        %v323 = vpack.c.bf16 %v303, %v303
        %v324 = vmul.f32 %v288, %v288
        %v325 = vmul.f32 %v289, %v289
        %v326 = vmul.f32 %v290, %v290
        %v327 = vmul.f32 %v291, %v291
        %v328 = vmul.f32 %v292, %v292
        %v329 = vmul.f32 %v293, %v293
        %v330 = vmul.f32 %v294, %v294
        %v331 = vmul.f32 %v295, %v295
        %v332 = vpack.c.bf16 %v324, %v324
        %v333 = vpack.c.bf16 %v325, %v325
        %v334 = vpack.c.bf16 %v326, %v326
        %v335 = vpack.c.bf16 %v327, %v327
        %v336 = vpack.c.bf16 %v328, %v328
        %v337 = vpack.c.bf16 %v329, %v329
        %v338 = vpack.c.bf16 %v330, %v330
        %v339 = vpack.c.bf16 %v331, %v331
        %v340 = vmul.f32 %v296, %v296
        %v341 = vmul.f32 %v297, %v297
        %v342 = vmul.f32 %v298, %v298
        %v343 = vmul.f32 %v299, %v299
        %v344 = vmul.f32 %v300, %v300
        %v345 = vmul.f32 %v301, %v301
        %v346 = vmul.f32 %v302, %v302
        %v347 = vmul.f32 %v303, %v303
        %v348 = vpack.c.bf16 %v340, %v340
        %v349 = vpack.c.bf16 %v341, %v341
        %v350 = vpack.c.bf16 %v342, %v342
        %v351 = vpack.c.bf16 %v343, %v343
        %v352 = vpack.c.bf16 %v344, %v344
        %v353 = vpack.c.bf16 %v345, %v345
        %v354 = vpack.c.bf16 %v346, %v346
        %v355 = vpack.c.bf16 %v347, %v347
        %v356 = vmul.f32 %v288, %v296
        %v357 = vmul.f32 %v289, %v297
        %v358 = vmul.f32 %v290, %v298
        %v359 = vmul.f32 %v291, %v299
        %v360 = vmul.f32 %v292, %v300
        %v361 = vmul.f32 %v293, %v301
        %v362 = vmul.f32 %v294, %v302
        %v363 = vmul.f32 %v295, %v303
        %v364 = vpack.c.bf16 %v356, %v356
        %v365 = vpack.c.bf16 %v357, %v357
        %v366 = vpack.c.bf16 %v358, %v358
        %v367 = vpack.c.bf16 %v359, %v359
        %v368 = vpack.c.bf16 %v360, %v360
        %v369 = vpack.c.bf16 %v361, %v361
        %v370 = vpack.c.bf16 %v362, %v362
        %v371 = vpack.c.bf16 %v363, %v363
        %v412 = vunpack.c.l.b16 %v308
        %v413 = vunpack.c.l.b16 %v309
        %v414 = vunpack.c.l.b16 %v310
        %v415 = vunpack.c.l.b16 %v311
        %v416 = vunpack.c.l.b16 %v312
        %v417 = vunpack.c.l.b16 %v313
        %v418 = vunpack.c.l.b16 %v314
        %v419 = vunpack.c.l.b16 %v315
        %v420 = vunpack.c.l.b16 %v316
        %v421 = vunpack.c.l.b16 %v317
        %v422 = vunpack.c.l.b16 %v318
        %v423 = vunpack.c.l.b16 %v319
        %v424 = vunpack.c.l.b16 %v320
        %v425 = vunpack.c.l.b16 %v321
        %v426 = vunpack.c.l.b16 %v322
        %v427 = vunpack.c.l.b16 %v323
        %v428 = vunpack.c.l.b16 %v332
        %v429 = vunpack.c.l.b16 %v333
        %v430 = vunpack.c.l.b16 %v334
        %v431 = vunpack.c.l.b16 %v335
        %v432 = vunpack.c.l.b16 %v336
        %v433 = vunpack.c.l.b16 %v337
        %v434 = vunpack.c.l.b16 %v338
        %v435 = vunpack.c.l.b16 %v339
        %v436 = vunpack.c.l.b16 %v348
        %v437 = vunpack.c.l.b16 %v349
        %v438 = vunpack.c.l.b16 %v350
        %v439 = vunpack.c.l.b16 %v351
        %v440 = vunpack.c.l.b16 %v352
        %v441 = vunpack.c.l.b16 %v353
        %v442 = vunpack.c.l.b16 %v354
        %v443 = vunpack.c.l.b16 %v355
        %v444 = vunpack.c.l.b16 %v364
        %v445 = vunpack.c.l.b16 %v365
        %v446 = vunpack.c.l.b16 %v366
        %v447 = vunpack.c.l.b16 %v367
        %v448 = vunpack.c.l.b16 %v368
        %v449 = vunpack.c.l.b16 %v369
        %v450 = vunpack.c.l.b16 %v370
        %v451 = vunpack.c.l.b16 %v371
        %v452 = vpack.c.b16 %v413, %v412
        %v453 = vpack.c.b16 %v415, %v414
        %v454 = vpack.c.b16 %v417, %v416
        %v455 = vpack.c.b16 %v419, %v418
        %v456 = vpack.c.b16 %v421, %v420
        %v457 = vpack.c.b16 %v423, %v422
        %v458 = vpack.c.b16 %v425, %v424
        %v459 = vpack.c.b16 %v427, %v426
        %v460 = vpack.c.b16 %v429, %v428
        %v461 = vpack.c.b16 %v431, %v430
        %v462 = vpack.c.b16 %v433, %v432
        %v463 = vpack.c.b16 %v435, %v434
        %v464 = vpack.c.b16 %v437, %v436
        %v465 = vpack.c.b16 %v439, %v438
        %v466 = vpack.c.b16 %v441, %v440
        %v467 = vpack.c.b16 %v443, %v442
        %v468 = vpack.c.b16 %v445, %v444
        %v469 = vpack.c.b16 %v447, %v446
        %v470 = vpack.c.b16 %v449, %v448
        %v471 = vpack.c.b16 %v451, %v450
        %v474 = vunpack.c.l.b16 %v306
        %v475 = vunpack.c.l.b16 %v307
        %v476 = vpack.c.b16 %v475, %v474
        %vm478 = vcmask 130048
        %v480 = vsel %vm478, %v452, 0
        %v483 = vsel %vm478, %v453, 0
        %v486 = vsel %vm478, %v454, 0
        %v489 = vsel %vm478, %v455, 0
        %v492 = vsel %vm478, %v456, 0
        %v495 = vsel %vm478, %v457, 0
        %v498 = vsel %vm478, %v458, 0
        %v501 = vsel %vm478, %v459, 0
        %v504 = vsel %vm478, %v460, 0
        %v507 = vsel %vm478, %v461, 0
        %v510 = vsel %vm478, %v462, 0
        %v513 = vsel %vm478, %v463, 0
        %v516 = vsel %vm478, %v464, 0
        %v519 = vsel %vm478, %v465, 0
        %v522 = vsel %vm478, %v466, 0
        %v525 = vsel %vm478, %v467, 0
        %v528 = vsel %vm478, %v468, 0
        %v531 = vsel %vm478, %v469, 0
        %v534 = vsel %vm478, %v470, 0
        %v537 = vsel %vm478, %v471, 0
        %539 = vmatpush.bf16.msra.mxu0 0
        %540 = vmatpush.bf16.msra.mxu0 0
        %541 = vmatpush.bf16.msra.mxu0 0
        %542 = vmatpush.bf16.msra.mxu0 0
        %543 = vmatpush.bf16.msra.mxu0 0
        %544 = vmatpush.bf16.msra.mxu0 0
        %545 = vmatpush.bf16.msra.mxu0 0
        %546 = vmatpush.bf16.msra.mxu0 %v476
        %547 = vmatmul.bf16.gmra.mxu0 %v480
        %v548 = vpop.f32.mrf.mxu0
        %v549 = vadd.f32 0.0, %v548
        %v550 = vpop.f32.mrf.mxu0
        %v551 = vadd.f32 0.0, %v550
        %552 = vmatmul.bf16.gmra.mxu0 %v483
        %v553 = vpop.f32.mrf.mxu0
        %v554 = vadd.f32 0.0, %v553
        %v555 = vpop.f32.mrf.mxu0
        %v556 = vadd.f32 0.0, %v555
        %557 = vmatmul.bf16.gmra.mxu0 %v486
        %v558 = vpop.f32.mrf.mxu0
        %v559 = vadd.f32 0.0, %v558
        %v560 = vpop.f32.mrf.mxu0
        %v561 = vadd.f32 0.0, %v560
        %562 = vmatmul.bf16.gmra.mxu0 %v489
        %v563 = vpop.f32.mrf.mxu0
        %v564 = vadd.f32 0.0, %v563
        %v565 = vpop.f32.mrf.mxu0
        %v566 = vadd.f32 0.0, %v565
        %567 = vmatmul.bf16.gmra.mxu0 %v492
        %v568 = vpop.f32.mrf.mxu0
        %v569 = vadd.f32 0.0, %v568
        %v570 = vpop.f32.mrf.mxu0
        %v571 = vadd.f32 0.0, %v570
        %572 = vmatmul.bf16.gmra.mxu0 %v495
        %v573 = vpop.f32.mrf.mxu0
        %v574 = vadd.f32 0.0, %v573
        %v575 = vpop.f32.mrf.mxu0
        %v576 = vadd.f32 0.0, %v575
        %577 = vmatmul.bf16.gmra.mxu0 %v498
        %v578 = vpop.f32.mrf.mxu0
        %v579 = vadd.f32 0.0, %v578
        %v580 = vpop.f32.mrf.mxu0
        %v581 = vadd.f32 0.0, %v580
        %582 = vmatmul.bf16.gmra.mxu0 %v501
        %v583 = vpop.f32.mrf.mxu0
        %v584 = vadd.f32 0.0, %v583
        %v585 = vpop.f32.mrf.mxu0
        %v586 = vadd.f32 0.0, %v585
        %587 = vmatmul.bf16.gmra.mxu0 %v504
        %v588 = vpop.f32.mrf.mxu0
        %v589 = vadd.f32 0.0, %v588
        %v590 = vpop.f32.mrf.mxu0
        %v591 = vadd.f32 0.0, %v590
        %592 = vmatmul.bf16.gmra.mxu0 %v507
        %v593 = vpop.f32.mrf.mxu0
        %v594 = vadd.f32 0.0, %v593
        %v595 = vpop.f32.mrf.mxu0
        %v596 = vadd.f32 0.0, %v595
        %597 = vmatmul.bf16.gmra.mxu0 %v510
        %v598 = vpop.f32.mrf.mxu0
        %v599 = vadd.f32 0.0, %v598
        %v600 = vpop.f32.mrf.mxu0
        %v601 = vadd.f32 0.0, %v600
        %602 = vmatmul.bf16.gmra.mxu0 %v513
        %v603 = vpop.f32.mrf.mxu0
        %v604 = vadd.f32 0.0, %v603
        %v605 = vpop.f32.mrf.mxu0
        %v606 = vadd.f32 0.0, %v605
        %607 = vmatmul.bf16.gmra.mxu0 %v516
        %v608 = vpop.f32.mrf.mxu0
        %v609 = vadd.f32 0.0, %v608
        %v610 = vpop.f32.mrf.mxu0
        %v611 = vadd.f32 0.0, %v610
        %612 = vmatmul.bf16.gmra.mxu0 %v519
        %v613 = vpop.f32.mrf.mxu0
        %v614 = vadd.f32 0.0, %v613
        %v615 = vpop.f32.mrf.mxu0
        %v616 = vadd.f32 0.0, %v615
        %617 = vmatmul.bf16.gmra.mxu0 %v522
        %v618 = vpop.f32.mrf.mxu0
        %v619 = vadd.f32 0.0, %v618
        %v620 = vpop.f32.mrf.mxu0
        %v621 = vadd.f32 0.0, %v620
        %622 = vmatmul.bf16.gmra.mxu0 %v525
        %v623 = vpop.f32.mrf.mxu0
        %v624 = vadd.f32 0.0, %v623
        %v625 = vpop.f32.mrf.mxu0
        %v626 = vadd.f32 0.0, %v625
        %627 = vmatmul.bf16.gmra.mxu0 %v528
        %v628 = vpop.f32.mrf.mxu0
        %v629 = vadd.f32 0.0, %v628
        %v630 = vpop.f32.mrf.mxu0
        %v631 = vadd.f32 0.0, %v630
        %632 = vmatmul.bf16.gmra.mxu0 %v531
        %v633 = vpop.f32.mrf.mxu0
        %v634 = vadd.f32 0.0, %v633
        %v635 = vpop.f32.mrf.mxu0
        %v636 = vadd.f32 0.0, %v635
        %637 = vmatmul.bf16.gmra.mxu0 %v534
        %v638 = vpop.f32.mrf.mxu0
        %v639 = vadd.f32 0.0, %v638
        %v640 = vpop.f32.mrf.mxu0
        %v641 = vadd.f32 0.0, %v640
        %642 = vmatmul.bf16.gmra.mxu0 %v537
        %v643 = vpop.f32.mrf.mxu0
        %v644 = vadd.f32 0.0, %v643
        %v645 = vpop.f32.mrf.mxu0
        %v646 = vadd.f32 0.0, %v645
        %647 = vdwg.mxu0
        %v648 = vpack.c.bf16 %v549, %v549
        %v649 = vpack.c.bf16 %v551, %v551
        %v650 = vpack.c.bf16 %v554, %v554
        %v651 = vpack.c.bf16 %v556, %v556
        %v652 = vpack.c.bf16 %v559, %v559
        %v653 = vpack.c.bf16 %v561, %v561
        %v654 = vpack.c.bf16 %v564, %v564
        %v655 = vpack.c.bf16 %v566, %v566
        %v656 = vpack.c.bf16 %v569, %v569
        %v657 = vpack.c.bf16 %v571, %v571
        %v658 = vpack.c.bf16 %v574, %v574
        %v659 = vpack.c.bf16 %v576, %v576
        %v660 = vpack.c.bf16 %v579, %v579
        %v661 = vpack.c.bf16 %v581, %v581
        %v662 = vpack.c.bf16 %v584, %v584
        %v663 = vpack.c.bf16 %v586, %v586
        %v664 = vpack.c.bf16 %v589, %v589
        %v665 = vpack.c.bf16 %v591, %v591
        %v666 = vpack.c.bf16 %v594, %v594
        %v667 = vpack.c.bf16 %v596, %v596
        %v668 = vpack.c.bf16 %v599, %v599
        %v669 = vpack.c.bf16 %v601, %v601
        %v670 = vpack.c.bf16 %v604, %v604
        %v671 = vpack.c.bf16 %v606, %v606
        %v672 = vpack.c.bf16 %v609, %v609
        %v673 = vpack.c.bf16 %v611, %v611
        %v674 = vpack.c.bf16 %v614, %v614
        %v675 = vpack.c.bf16 %v616, %v616
        %v676 = vpack.c.bf16 %v619, %v619
        %v677 = vpack.c.bf16 %v621, %v621
        %v678 = vpack.c.bf16 %v624, %v624
        %v679 = vpack.c.bf16 %v626, %v626
        %v680 = vpack.c.bf16 %v629, %v629
        %v681 = vpack.c.bf16 %v631, %v631
        %v682 = vpack.c.bf16 %v634, %v634
        %v683 = vpack.c.bf16 %v636, %v636
        %v684 = vpack.c.bf16 %v639, %v639
        %v685 = vpack.c.bf16 %v641, %v641
        %v686 = vpack.c.bf16 %v644, %v644
        %v687 = vpack.c.bf16 %v646, %v646
        %v690 = vunpack.c.l.b16 %v304
        %v691 = vunpack.c.l.b16 %v305
        %v692 = vpack.c.b16 %v691, %v690
        %v695 = vunpack.c.l.b16 %v648
        %v696 = vunpack.c.l.b16 %v649
        %v697 = vpack.c.b16 %v696, %v695
        %v700 = vsel %vm478, %v692, 0
        %702 = vmatpush.bf16.msra.mxu0 0
        %703 = vmatpush.bf16.msra.mxu0 0
        %704 = vmatpush.bf16.msra.mxu0 0
        %705 = vmatpush.bf16.msra.mxu0 0
        %706 = vmatpush.bf16.msra.mxu0 0
        %707 = vmatpush.bf16.msra.mxu0 0
        %708 = vmatpush.bf16.msra.mxu0 0
        %709 = vmatpush.bf16.msra.mxu0 %v697
        %710 = vmatmul.bf16.gmra.mxu0 %v700
        %v711 = vpop.f32.mrf.mxu0
        %v712 = vadd.f32 0.0, %v711
        %v713 = vpop.f32.mrf.mxu0
        %v714 = vadd.f32 0.0, %v713
        %715 = vdwg.mxu0
        %v718 = vunpack.c.l.b16 %v650
        %v719 = vunpack.c.l.b16 %v651
        %v720 = vpack.c.b16 %v719, %v718
        %722 = vmatpush.bf16.msra.mxu0 0
        %723 = vmatpush.bf16.msra.mxu0 0
        %724 = vmatpush.bf16.msra.mxu0 0
        %725 = vmatpush.bf16.msra.mxu0 0
        %726 = vmatpush.bf16.msra.mxu0 0
        %727 = vmatpush.bf16.msra.mxu0 0
        %728 = vmatpush.bf16.msra.mxu0 0
        %729 = vmatpush.bf16.msra.mxu0 %v720
        %730 = vmatmul.bf16.gmra.mxu0 %v700
        %v731 = vpop.f32.mrf.mxu0
        %v732 = vadd.f32 0.0, %v731
        %v733 = vpop.f32.mrf.mxu0
        %v734 = vadd.f32 0.0, %v733
        %735 = vdwg.mxu0
        %v738 = vunpack.c.l.b16 %v652
        %v739 = vunpack.c.l.b16 %v653
        %v740 = vpack.c.b16 %v739, %v738
        %742 = vmatpush.bf16.msra.mxu0 0
        %743 = vmatpush.bf16.msra.mxu0 0
        %744 = vmatpush.bf16.msra.mxu0 0
        %745 = vmatpush.bf16.msra.mxu0 0
        %746 = vmatpush.bf16.msra.mxu0 0
        %747 = vmatpush.bf16.msra.mxu0 0
        %748 = vmatpush.bf16.msra.mxu0 0
        %749 = vmatpush.bf16.msra.mxu0 %v740
        %750 = vmatmul.bf16.gmra.mxu0 %v700
        %v751 = vpop.f32.mrf.mxu0
        %v752 = vadd.f32 0.0, %v751
        %v753 = vpop.f32.mrf.mxu0
        %v754 = vadd.f32 0.0, %v753
        %755 = vdwg.mxu0
        %v758 = vunpack.c.l.b16 %v654
        %v759 = vunpack.c.l.b16 %v655
        %v760 = vpack.c.b16 %v759, %v758
        %762 = vmatpush.bf16.msra.mxu0 0
        %763 = vmatpush.bf16.msra.mxu0 0
        %764 = vmatpush.bf16.msra.mxu0 0
        %765 = vmatpush.bf16.msra.mxu0 0
        %766 = vmatpush.bf16.msra.mxu0 0
        %767 = vmatpush.bf16.msra.mxu0 0
        %768 = vmatpush.bf16.msra.mxu0 0
        %769 = vmatpush.bf16.msra.mxu0 %v760
        %770 = vmatmul.bf16.gmra.mxu0 %v700
        %v771 = vpop.f32.mrf.mxu0
        %v772 = vadd.f32 0.0, %v771
        %v773 = vpop.f32.mrf.mxu0
        %v774 = vadd.f32 0.0, %v773
        %775 = vdwg.mxu0
        %v778 = vunpack.c.l.b16 %v656
        %v779 = vunpack.c.l.b16 %v657
        %v780 = vpack.c.b16 %v779, %v778
        %782 = vmatpush.bf16.msra.mxu0 0
        %783 = vmatpush.bf16.msra.mxu0 0
        %784 = vmatpush.bf16.msra.mxu0 0
        %785 = vmatpush.bf16.msra.mxu0 0
        %786 = vmatpush.bf16.msra.mxu0 0
        %787 = vmatpush.bf16.msra.mxu0 0
        %788 = vmatpush.bf16.msra.mxu0 0
        %789 = vmatpush.bf16.msra.mxu0 %v780
        %790 = vmatmul.bf16.gmra.mxu0 %v700
        %v791 = vpop.f32.mrf.mxu0
        %v792 = vadd.f32 0.0, %v791
        %v793 = vpop.f32.mrf.mxu0
        %v794 = vadd.f32 0.0, %v793
        %795 = vdwg.mxu0
        %v798 = vunpack.c.l.b16 %v658
        %v799 = vunpack.c.l.b16 %v659
        %v800 = vpack.c.b16 %v799, %v798
        %802 = vmatpush.bf16.msra.mxu0 0
        %803 = vmatpush.bf16.msra.mxu0 0
        %804 = vmatpush.bf16.msra.mxu0 0
        %805 = vmatpush.bf16.msra.mxu0 0
        %806 = vmatpush.bf16.msra.mxu0 0
        %807 = vmatpush.bf16.msra.mxu0 0
        %808 = vmatpush.bf16.msra.mxu0 0
        %809 = vmatpush.bf16.msra.mxu0 %v800
        %810 = vmatmul.bf16.gmra.mxu0 %v700
        %v811 = vpop.f32.mrf.mxu0
        %v812 = vadd.f32 0.0, %v811
        %v813 = vpop.f32.mrf.mxu0
        %v814 = vadd.f32 0.0, %v813
        %815 = vdwg.mxu0
        %v818 = vunpack.c.l.b16 %v660
        %v819 = vunpack.c.l.b16 %v661
        %v820 = vpack.c.b16 %v819, %v818
        %822 = vmatpush.bf16.msra.mxu0 0
        %823 = vmatpush.bf16.msra.mxu0 0
        %824 = vmatpush.bf16.msra.mxu0 0
        %825 = vmatpush.bf16.msra.mxu0 0
        %826 = vmatpush.bf16.msra.mxu0 0
        %827 = vmatpush.bf16.msra.mxu0 0
        %828 = vmatpush.bf16.msra.mxu0 0
        %829 = vmatpush.bf16.msra.mxu0 %v820
        %830 = vmatmul.bf16.gmra.mxu0 %v700
        %v831 = vpop.f32.mrf.mxu0
        %v832 = vadd.f32 0.0, %v831
        %v833 = vpop.f32.mrf.mxu0
        %v834 = vadd.f32 0.0, %v833
        %835 = vdwg.mxu0
        %v838 = vunpack.c.l.b16 %v662
        %v839 = vunpack.c.l.b16 %v663
        %v840 = vpack.c.b16 %v839, %v838
        %842 = vmatpush.bf16.msra.mxu0 0
        %843 = vmatpush.bf16.msra.mxu0 0
        %844 = vmatpush.bf16.msra.mxu0 0
        %845 = vmatpush.bf16.msra.mxu0 0
        %846 = vmatpush.bf16.msra.mxu0 0
        %847 = vmatpush.bf16.msra.mxu0 0
        %848 = vmatpush.bf16.msra.mxu0 0
        %849 = vmatpush.bf16.msra.mxu0 %v840
        %850 = vmatmul.bf16.gmra.mxu0 %v700
        %v851 = vpop.f32.mrf.mxu0
        %v852 = vadd.f32 0.0, %v851
        %v853 = vpop.f32.mrf.mxu0
        %v854 = vadd.f32 0.0, %v853
        %855 = vdwg.mxu0
        %v858 = vunpack.c.l.b16 %v664
        %v859 = vunpack.c.l.b16 %v665
        %v860 = vpack.c.b16 %v859, %v858
        %862 = vmatpush.bf16.msra.mxu0 0
        %863 = vmatpush.bf16.msra.mxu0 0
        %864 = vmatpush.bf16.msra.mxu0 0
        %865 = vmatpush.bf16.msra.mxu0 0
        %866 = vmatpush.bf16.msra.mxu0 0
        %867 = vmatpush.bf16.msra.mxu0 0
        %868 = vmatpush.bf16.msra.mxu0 0
        %869 = vmatpush.bf16.msra.mxu0 %v860
        %870 = vmatmul.bf16.gmra.mxu0 %v700
        %v871 = vpop.f32.mrf.mxu0
        %v872 = vadd.f32 0.0, %v871
        %v873 = vpop.f32.mrf.mxu0
        %v874 = vadd.f32 0.0, %v873
        %875 = vdwg.mxu0
        %v878 = vunpack.c.l.b16 %v666
        %v879 = vunpack.c.l.b16 %v667
        %v880 = vpack.c.b16 %v879, %v878
        %882 = vmatpush.bf16.msra.mxu0 0
        %883 = vmatpush.bf16.msra.mxu0 0
        %884 = vmatpush.bf16.msra.mxu0 0
        %885 = vmatpush.bf16.msra.mxu0 0
        %886 = vmatpush.bf16.msra.mxu0 0
        %887 = vmatpush.bf16.msra.mxu0 0
        %888 = vmatpush.bf16.msra.mxu0 0
        %889 = vmatpush.bf16.msra.mxu0 %v880
        %890 = vmatmul.bf16.gmra.mxu0 %v700
        %v891 = vpop.f32.mrf.mxu0
        %v892 = vadd.f32 0.0, %v891
        %v893 = vpop.f32.mrf.mxu0
        %v894 = vadd.f32 0.0, %v893
        %895 = vdwg.mxu0
        %v898 = vunpack.c.l.b16 %v668
        %v899 = vunpack.c.l.b16 %v669
        %v900 = vpack.c.b16 %v899, %v898
        %902 = vmatpush.bf16.msra.mxu0 0
        %903 = vmatpush.bf16.msra.mxu0 0
        %904 = vmatpush.bf16.msra.mxu0 0
        %905 = vmatpush.bf16.msra.mxu0 0
        %906 = vmatpush.bf16.msra.mxu0 0
        %907 = vmatpush.bf16.msra.mxu0 0
        %908 = vmatpush.bf16.msra.mxu0 0
        %909 = vmatpush.bf16.msra.mxu0 %v900
        %910 = vmatmul.bf16.gmra.mxu0 %v700
        %v911 = vpop.f32.mrf.mxu0
        %v912 = vadd.f32 0.0, %v911
        %v913 = vpop.f32.mrf.mxu0
        %v914 = vadd.f32 0.0, %v913
        %915 = vdwg.mxu0
        %v918 = vunpack.c.l.b16 %v670
        %v919 = vunpack.c.l.b16 %v671
        %v920 = vpack.c.b16 %v919, %v918
        %922 = vmatpush.bf16.msra.mxu0 0
        %923 = vmatpush.bf16.msra.mxu0 0
        %924 = vmatpush.bf16.msra.mxu0 0
        %925 = vmatpush.bf16.msra.mxu0 0
        %926 = vmatpush.bf16.msra.mxu0 0
        %927 = vmatpush.bf16.msra.mxu0 0
        %928 = vmatpush.bf16.msra.mxu0 0
        %929 = vmatpush.bf16.msra.mxu0 %v920
        %930 = vmatmul.bf16.gmra.mxu0 %v700
        %v931 = vpop.f32.mrf.mxu0
        %v932 = vadd.f32 0.0, %v931
        %v933 = vpop.f32.mrf.mxu0
        %v934 = vadd.f32 0.0, %v933
        %935 = vdwg.mxu0
        %v938 = vunpack.c.l.b16 %v672
        %v939 = vunpack.c.l.b16 %v673
        %v940 = vpack.c.b16 %v939, %v938
        %942 = vmatpush.bf16.msra.mxu0 0
        %943 = vmatpush.bf16.msra.mxu0 0
        %944 = vmatpush.bf16.msra.mxu0 0
        %945 = vmatpush.bf16.msra.mxu0 0
        %946 = vmatpush.bf16.msra.mxu0 0
        %947 = vmatpush.bf16.msra.mxu0 0
        %948 = vmatpush.bf16.msra.mxu0 0
        %949 = vmatpush.bf16.msra.mxu0 %v940
        %950 = vmatmul.bf16.gmra.mxu0 %v700
        %v951 = vpop.f32.mrf.mxu0
        %v952 = vadd.f32 0.0, %v951
        %v953 = vpop.f32.mrf.mxu0
        %v954 = vadd.f32 0.0, %v953
        %955 = vdwg.mxu0
        %v958 = vunpack.c.l.b16 %v674
        %v959 = vunpack.c.l.b16 %v675
        %v960 = vpack.c.b16 %v959, %v958
        %962 = vmatpush.bf16.msra.mxu0 0
        %963 = vmatpush.bf16.msra.mxu0 0
        %964 = vmatpush.bf16.msra.mxu0 0
        %965 = vmatpush.bf16.msra.mxu0 0
        %966 = vmatpush.bf16.msra.mxu0 0
        %967 = vmatpush.bf16.msra.mxu0 0
        %968 = vmatpush.bf16.msra.mxu0 0
        %969 = vmatpush.bf16.msra.mxu0 %v960
        %970 = vmatmul.bf16.gmra.mxu0 %v700
        %v971 = vpop.f32.mrf.mxu0
        %v972 = vadd.f32 0.0, %v971
        %v973 = vpop.f32.mrf.mxu0
        %v974 = vadd.f32 0.0, %v973
        %975 = vdwg.mxu0
        %v978 = vunpack.c.l.b16 %v676
        %v979 = vunpack.c.l.b16 %v677
        %v980 = vpack.c.b16 %v979, %v978
        %982 = vmatpush.bf16.msra.mxu0 0
        %983 = vmatpush.bf16.msra.mxu0 0
        %984 = vmatpush.bf16.msra.mxu0 0
        %985 = vmatpush.bf16.msra.mxu0 0
        %986 = vmatpush.bf16.msra.mxu0 0
        %987 = vmatpush.bf16.msra.mxu0 0
        %988 = vmatpush.bf16.msra.mxu0 0
        %989 = vmatpush.bf16.msra.mxu0 %v980
        %990 = vmatmul.bf16.gmra.mxu0 %v700
        %v991 = vpop.f32.mrf.mxu0
        %v992 = vadd.f32 0.0, %v991
        %v993 = vpop.f32.mrf.mxu0
        %v994 = vadd.f32 0.0, %v993
        %995 = vdwg.mxu0
        %v998 = vunpack.c.l.b16 %v678
        %v999 = vunpack.c.l.b16 %v679
        %v1000 = vpack.c.b16 %v999, %v998
        %1002 = vmatpush.bf16.msra.mxu0 0
        %1003 = vmatpush.bf16.msra.mxu0 0
        %1004 = vmatpush.bf16.msra.mxu0 0
        %1005 = vmatpush.bf16.msra.mxu0 0
        %1006 = vmatpush.bf16.msra.mxu0 0
        %1007 = vmatpush.bf16.msra.mxu0 0
        %1008 = vmatpush.bf16.msra.mxu0 0
        %1009 = vmatpush.bf16.msra.mxu0 %v1000
        %1010 = vmatmul.bf16.gmra.mxu0 %v700
        %v1011 = vpop.f32.mrf.mxu0
        %v1012 = vadd.f32 0.0, %v1011
        %v1013 = vpop.f32.mrf.mxu0
        %v1014 = vadd.f32 0.0, %v1013
        %1015 = vdwg.mxu0
        %v1018 = vunpack.c.l.b16 %v680
        %v1019 = vunpack.c.l.b16 %v681
        %v1020 = vpack.c.b16 %v1019, %v1018
        %1022 = vmatpush.bf16.msra.mxu0 0
        %1023 = vmatpush.bf16.msra.mxu0 0
        %1024 = vmatpush.bf16.msra.mxu0 0
        %1025 = vmatpush.bf16.msra.mxu0 0
        %1026 = vmatpush.bf16.msra.mxu0 0
        %1027 = vmatpush.bf16.msra.mxu0 0
        %1028 = vmatpush.bf16.msra.mxu0 0
        %1029 = vmatpush.bf16.msra.mxu0 %v1020
        %1030 = vmatmul.bf16.gmra.mxu0 %v700
        %v1031 = vpop.f32.mrf.mxu0
        %v1032 = vadd.f32 0.0, %v1031
        %v1033 = vpop.f32.mrf.mxu0
        %v1034 = vadd.f32 0.0, %v1033
        %1035 = vdwg.mxu0
        %v1038 = vunpack.c.l.b16 %v682
        %v1039 = vunpack.c.l.b16 %v683
        %v1040 = vpack.c.b16 %v1039, %v1038
        %1042 = vmatpush.bf16.msra.mxu0 0
        %1043 = vmatpush.bf16.msra.mxu0 0
        %1044 = vmatpush.bf16.msra.mxu0 0
        %1045 = vmatpush.bf16.msra.mxu0 0
        %1046 = vmatpush.bf16.msra.mxu0 0
        %1047 = vmatpush.bf16.msra.mxu0 0
        %1048 = vmatpush.bf16.msra.mxu0 0
        %1049 = vmatpush.bf16.msra.mxu0 %v1040
        %1050 = vmatmul.bf16.gmra.mxu0 %v700
        %v1051 = vpop.f32.mrf.mxu0
        %v1052 = vadd.f32 0.0, %v1051
        %v1053 = vpop.f32.mrf.mxu0
        %v1054 = vadd.f32 0.0, %v1053
        %1055 = vdwg.mxu0
        %v1058 = vunpack.c.l.b16 %v684
        %v1059 = vunpack.c.l.b16 %v685
        %v1060 = vpack.c.b16 %v1059, %v1058
        %1062 = vmatpush.bf16.msra.mxu0 0
        %1063 = vmatpush.bf16.msra.mxu0 0
        %1064 = vmatpush.bf16.msra.mxu0 0
        %1065 = vmatpush.bf16.msra.mxu0 0
        %1066 = vmatpush.bf16.msra.mxu0 0
        %1067 = vmatpush.bf16.msra.mxu0 0
        %1068 = vmatpush.bf16.msra.mxu0 0
        %1069 = vmatpush.bf16.msra.mxu0 %v1060
        %1070 = vmatmul.bf16.gmra.mxu0 %v700
        %v1071 = vpop.f32.mrf.mxu0
        %v1072 = vadd.f32 0.0, %v1071
        %v1073 = vpop.f32.mrf.mxu0
        %v1074 = vadd.f32 0.0, %v1073
        %1075 = vdwg.mxu0
        %v1078 = vunpack.c.l.b16 %v686
        %v1079 = vunpack.c.l.b16 %v687
        %v1080 = vpack.c.b16 %v1079, %v1078
        %1082 = vmatpush.bf16.msra.mxu0 0
        %1083 = vmatpush.bf16.msra.mxu0 0
        %1084 = vmatpush.bf16.msra.mxu0 0
        %1085 = vmatpush.bf16.msra.mxu0 0
        %1086 = vmatpush.bf16.msra.mxu0 0
        %1087 = vmatpush.bf16.msra.mxu0 0
        %1088 = vmatpush.bf16.msra.mxu0 0
        %1089 = vmatpush.bf16.msra.mxu0 %v1080
        %1090 = vmatmul.bf16.gmra.mxu0 %v700
        %v1091 = vpop.f32.mrf.mxu0
        %v1092 = vadd.f32 0.0, %v1091
        %v1093 = vpop.f32.mrf.mxu0
        %v1094 = vadd.f32 0.0, %v1093
        %1095 = vdwg.mxu0
        %v1096 = vmul.f32 %v712, %v712
        %v1097 = vmul.f32 %v714, %v714
        %v1098 = vmul.f32 %v732, %v732
        %v1099 = vmul.f32 %v734, %v734
        %v1100 = vmul.f32 %v752, %v752
        %v1101 = vmul.f32 %v754, %v754
        %v1102 = vmul.f32 %v772, %v772
        %v1103 = vmul.f32 %v774, %v774
        %v1104 = vmul.f32 %v792, %v792
        %v1105 = vmul.f32 %v794, %v794
        %v1106 = vmul.f32 %v812, %v812
        %v1107 = vmul.f32 %v814, %v814
        %v1108 = vmul.f32 %v832, %v832
        %v1109 = vmul.f32 %v834, %v834
        %v1110 = vmul.f32 %v852, %v852
        %v1111 = vmul.f32 %v854, %v854
        %v1112 = vmul.f32 %v712, %v792
        %v1113 = vmul.f32 %v714, %v794
        %v1114 = vmul.f32 %v732, %v812
        %v1115 = vmul.f32 %v734, %v814
        %v1116 = vmul.f32 %v752, %v832
        %v1117 = vmul.f32 %v754, %v834
        %v1118 = vmul.f32 %v772, %v852
        %v1119 = vmul.f32 %v774, %v854
        %v1120 = vmul.f32 %v1112, 2.0
        %v1121 = vmul.f32 %v1113, 2.0
        %v1122 = vmul.f32 %v1114, 2.0
        %v1123 = vmul.f32 %v1115, 2.0
        %v1124 = vmul.f32 %v1116, 2.0
        %v1125 = vmul.f32 %v1117, 2.0
        %v1126 = vmul.f32 %v1118, 2.0
        %v1127 = vmul.f32 %v1119, 2.0
        %v1128 = vadd.f32 %v1120, 0.0001
        %v1129 = vadd.f32 %v1121, 0.0001
        %v1130 = vadd.f32 %v1122, 0.0001
        %v1131 = vadd.f32 %v1123, 0.0001
        %v1132 = vadd.f32 %v1124, 0.0001
        %v1133 = vadd.f32 %v1125, 0.0001
        %v1134 = vadd.f32 %v1126, 0.0001
        %v1135 = vadd.f32 %v1127, 0.0001
        %v1136 = vsub.f32 %v1032, %v1112
        %v1137 = vsub.f32 %v1034, %v1113
        %v1138 = vsub.f32 %v1052, %v1114
        %v1139 = vsub.f32 %v1054, %v1115
        %v1140 = vsub.f32 %v1072, %v1116
        %v1141 = vsub.f32 %v1074, %v1117
        %v1142 = vsub.f32 %v1092, %v1118
        %v1143 = vsub.f32 %v1094, %v1119
        %v1144 = vmul.f32 %v1136, 2.0
        %v1145 = vmul.f32 %v1137, 2.0
        %v1146 = vmul.f32 %v1138, 2.0
        %v1147 = vmul.f32 %v1139, 2.0
        %v1148 = vmul.f32 %v1140, 2.0
        %v1149 = vmul.f32 %v1141, 2.0
        %v1150 = vmul.f32 %v1142, 2.0
        %v1151 = vmul.f32 %v1143, 2.0
        %v1152 = vadd.f32 %v1144, 0.0009
        %v1153 = vadd.f32 %v1145, 0.0009
        %v1154 = vadd.f32 %v1146, 0.0009
        %v1155 = vadd.f32 %v1147, 0.0009
        %v1156 = vadd.f32 %v1148, 0.0009
        %v1157 = vadd.f32 %v1149, 0.0009
        %v1158 = vadd.f32 %v1150, 0.0009
        %v1159 = vadd.f32 %v1151, 0.0009
        %v1160 = vmul.f32 %v1128, %v1152
        %v1161 = vmul.f32 %v1129, %v1153
        %v1162 = vmul.f32 %v1130, %v1154
        %v1163 = vmul.f32 %v1131, %v1155
        %v1164 = vmul.f32 %v1132, %v1156
        %v1165 = vmul.f32 %v1133, %v1157
        %v1166 = vmul.f32 %v1134, %v1158
        %v1167 = vmul.f32 %v1135, %v1159
        %v1168 = vadd.f32 %v1096, %v1104
        %v1169 = vadd.f32 %v1097, %v1105
        %v1170 = vadd.f32 %v1098, %v1106
        %v1171 = vadd.f32 %v1099, %v1107
        %v1172 = vadd.f32 %v1100, %v1108
        %v1173 = vadd.f32 %v1101, %v1109
        %v1174 = vadd.f32 %v1102, %v1110
        %v1175 = vadd.f32 %v1103, %v1111
        %v1176 = vadd.f32 %v1168, 0.0001
        %v1177 = vadd.f32 %v1169, 0.0001
        %v1178 = vadd.f32 %v1170, 0.0001
        %v1179 = vadd.f32 %v1171, 0.0001
        %v1180 = vadd.f32 %v1172, 0.0001
        %v1181 = vadd.f32 %v1173, 0.0001
        %v1182 = vadd.f32 %v1174, 0.0001
        %v1183 = vadd.f32 %v1175, 0.0001
        %v1184 = vsub.f32 %v872, %v1096
        %v1185 = vsub.f32 %v874, %v1097
        %v1186 = vsub.f32 %v892, %v1098
        %v1187 = vsub.f32 %v894, %v1099
        %v1188 = vsub.f32 %v912, %v1100
        %v1189 = vsub.f32 %v914, %v1101
        %v1190 = vsub.f32 %v932, %v1102
        %v1191 = vsub.f32 %v934, %v1103
        %v1192 = vsub.f32 %v952, %v1104
        %v1193 = vsub.f32 %v954, %v1105
        %v1194 = vsub.f32 %v972, %v1106
        %v1195 = vsub.f32 %v974, %v1107
        %v1196 = vsub.f32 %v992, %v1108
        %v1197 = vsub.f32 %v994, %v1109
        %v1198 = vsub.f32 %v1012, %v1110
        %v1199 = vsub.f32 %v1014, %v1111
        %v1200 = vadd.f32 %v1184, %v1192
        %v1201 = vadd.f32 %v1185, %v1193
        %v1202 = vadd.f32 %v1186, %v1194
        %v1203 = vadd.f32 %v1187, %v1195
        %v1204 = vadd.f32 %v1188, %v1196
        %v1205 = vadd.f32 %v1189, %v1197
        %v1206 = vadd.f32 %v1190, %v1198
        %v1207 = vadd.f32 %v1191, %v1199
        %v1208 = vadd.f32 %v1200, 0.0009
        %v1209 = vadd.f32 %v1201, 0.0009
        %v1210 = vadd.f32 %v1202, 0.0009
        %v1211 = vadd.f32 %v1203, 0.0009
        %v1212 = vadd.f32 %v1204, 0.0009
        %v1213 = vadd.f32 %v1205, 0.0009
        %v1214 = vadd.f32 %v1206, 0.0009
        %v1215 = vadd.f32 %v1207, 0.0009
        %v1216 = vmul.f32 %v1176, %v1208
        %v1217 = vmul.f32 %v1177, %v1209
        %v1218 = vmul.f32 %v1178, %v1210
        %v1219 = vmul.f32 %v1179, %v1211
        %v1220 = vmul.f32 %v1180, %v1212
        %v1221 = vmul.f32 %v1181, %v1213
        %v1222 = vmul.f32 %v1182, %v1214
        %v1223 = vmul.f32 %v1183, %v1215
        %v1224 = vrcp.pop %v1216
        %v1225 = vrcp.pop %v1217
        %v1226 = vrcp.pop %v1218
        %v1227 = vrcp.pop %v1219
        %v1228 = vrcp.pop %v1220
        %v1229 = vrcp.pop %v1221
        %v1230 = vrcp.pop %v1222
        %v1231 = vrcp.pop %v1223
        %v1232 = vmul.f32 %v1160, %v1224
        %v1233 = vmul.f32 %v1161, %v1225
        %v1234 = vmul.f32 %v1162, %v1226
        %v1235 = vmul.f32 %v1163, %v1227
        %v1236 = vmul.f32 %v1164, %v1228
        %v1237 = vmul.f32 %v1165, %v1229
        %v1238 = vmul.f32 %v1166, %v1230
        %v1239 = vmul.f32 %v1167, %v1231
        %v1240 = vsel %vm478, %v1232, 0.0
        %v1241 = vsel %vm478, %v1234, 0.0
        %v1242 = vadd.f32 %v1240, %v1241
        %v1243 = vsel %vm478, %v1236, 0.0
        %v1244 = vadd.f32 %v1242, %v1243
        %v1245 = vsel %vm478, %v1238, 0.0
        %v1246 = vadd.f32 %v1244, %v1245
        %v1247 = vsel %vm478, %v1233, 0.0
        %v1248 = vsel %vm478, %v1235, 0.0
        %v1249 = vadd.f32 %v1247, %v1248
        %v1250 = vsel %vm478, %v1237, 0.0
        %v1251 = vadd.f32 %v1249, %v1250
        %v1252 = vsel %vm478, %v1239, 0.0
        %v1253 = vadd.f32 %v1251, %v1252
        %v1254 = vsel %vm478, %v1246, 0.0
        %v1255 = vsel %vm478, %v1253, 0.0
        %v1256 = vadd.f32 %v1254, %v1255
        %v1257 = vrot.slane %v1256, 4
        %v1258 = vadd.f32 %v1256, %v1257
        %v1259 = vrot.slane %v1258, 2
        %v1260 = vadd.f32 %v1258, %v1259
        %v1261 = vrot.slane %v1260, 1
        %v1262 = vadd.f32 %v1260, %v1261
        %vm1263 = vcmask 122880
        %1264 = vst.msk [vmem:[%s286] sm:$0x1] %vm1263, %v1262
        %s1265 = sand.u32 %s122, 1
        %s1266 = scalar_lea.sflag [#allocation4], %s1265
        %s1267 = sand.u32 %s122, 1
        %s1268 = scalar_lea.vmem [#allocation9], %s1267
        // Predicated region
        $region53: #{tpu_custom_call.1} parent=35 // pred_check
          %p1269 = pneg %p132
        $region54: #{tpu_custom_call.1} parent=35 // pred_check_branch
          %1271 = sbr.rel (%p1269) target = $region56
        $region55: #{tpu_custom_call.1} parent=35 // pred_region
          %1273 = vsyncadd %s1266, 0
          %s1274 = scalar_lea.hbm %s4, %s20
          %s1276 = sshll.u32 %s1268, 4
          %s1277 = int_to_ptr.vmem [resolvable:$true] %s1276
          %s1278 = sshll.u32 %s1274, 4
          %s1279 = int_to_ptr.hbm [resolvable:$true] %s1278
          %1281 = dma.vmem_to_hbm [thread:$0]  %s1277, 16, %s1279, %s1266
        $region56: #{tpu_custom_call.1} parent=35 // pred_fallthru
          _
      $region36: #{tpu_custom_call.1} parent=5 // pred_fallthru
        _
      %p1282 = scmp.le.s32.totalorder 2, %s15
      // Predicated region
      $region57: #{tpu_custom_call.1} parent=5 // pred_check
        %p1283 = pneg %p1282
      $region58: #{tpu_custom_call.1} parent=5 // pred_check_branch
        %1285 = sbr.rel (%p1283) target = $region60
      $region59: #{tpu_custom_call.1} parent=5 // pred_region
        %s1286 = ssub.s32 %s15, 2
        // Predicated region
        $region61: #{tpu_custom_call.1} parent=59 // pred_check
          %p1287 = pneg %p138
        $region62: #{tpu_custom_call.1} parent=59 // pred_check_branch
          %1289 = sbr.rel (%p1287) target = $region64
        $region63: #{tpu_custom_call.1} parent=59 // pred_region
          %s1290 = sand.u32 %s123, 1
          %s1291 = scalar_lea.sflag [#allocation4], %s1290
          %s1292 = sand.u32 %s123, 1
          %s1293 = scalar_lea.vmem [#allocation9], %s1292
          %1295 = dma.done %s1291, 16
        $region64: #{tpu_custom_call.1} parent=59 // pred_fallthru
          _
      $region60: #{tpu_custom_call.1} parent=5 // pred_fallthru
        _
    $region6: #{tpu_custom_call.1} parent=1 // loop_footer
      %s19 = sadd.s32 1, %s15
    $region7: #{tpu_custom_call.1} parent=1 // loop_footer_branch
      %14 = sbr.rel target = $region3
    $region8: #{tpu_custom_call.1} parent=1 // loop_exit
      _
    %1296 = vsyncpa [#allocation3], 1
    %s1297 = scalar_lea.sflag [#allocation3], 1
    %1298 = vsyncpa %s1297, 1
    %1299 = vsyncpa [#allocation6], 1
    %1300 = vsyncpa [#allocation4], 1
    %s1301 = scalar_lea.sflag [#allocation4], 1
    %1302 = vsyncpa %s1301, 1

</llo_original>
